<compile_context>
chip_gen: v7x
topology: tpu7x:2x2x1
jax: 0.10.0
libtpu: 0.0.40
codegen_flags: <defaults>
</compile_context>

<pallas_src>
import functools
import math

import jax
import jax.numpy as jnp
from jax.experimental import pallas as pl
from jax.experimental.pallas import tpu as pltpu


def _round_up(x, m):
    return (x + m - 1) // m * m


# ------------------------------ Pallas kernel -------------------------------

def _downsample_kernel(x_ref, w_ref, mask_ref, o_ref, col_ref, *,
                       taps, cin_pad, count, apply_norm, apply_act,
                       eps, negative_slope):
    """Fused stride-2 3x3x3 conv + InstanceNorm + LeakyReLU for one batch elem.

    x_ref    : (1, 8, cin_pad, Mp)      bf16  8 parity phases, flat spatial on lanes
    w_ref    : (cout_pad, 27*cin_pad)   bf16  im2col weights
    mask_ref : (1, Mout)                f32   1.0 at valid output positions
    o_ref    : (1, cout_pad, Mout)      f32
    col_ref  : (27*cin_pad, Mout)       bf16  VMEM im2col scratch
    """
    mout = o_ref.shape[2]

    # Fill the im2col operand with 27 shifted ref->scratch copies.  The 8
    # phase slabs are never loaded as whole values; each tap reads only its
    # (cin_pad, Mout) window.  Scratch rows are bf16-tile aligned (cin_pad=16k).
    for t, (p, s) in enumerate(taps):                       # 27 static taps
        col_ref[t * cin_pad:(t + 1) * cin_pad, :] = x_ref[0, p, :, s:s + mout]

    # Single MXU matmul, f32 accumulation stays inside the MXU.
    y = jnp.dot(w_ref[...], col_ref[...],
                preferred_element_type=jnp.float32)         # (cout_pad, Mout)

    mask = mask_ref[...]                                    # (1, Mout)
    if apply_norm:
        inv_cnt = 1.0 / float(count)
        mean = jnp.sum(y * mask, axis=1, keepdims=True) * inv_cnt
        cen = (y - mean) * mask                             # invalid lanes -> 0
        var = jnp.sum(cen * cen, axis=1, keepdims=True) * inv_cnt
        y = cen * jax.lax.rsqrt(var + eps)
    else:
        y = y * mask                                        # keep HBM output clean
    if apply_act:
        y = jnp.where(y >= 0, y, negative_slope * y)
    o_ref[0] = y.astype(o_ref.dtype)


# --------------------------------- wrapper ----------------------------------

def downsample_forward(w, x, *, apply_norm=True, apply_act=True,
                       eps=1e-5, negative_slope=0.2):
    """Downsample.forward.  x: (B, Cin, D, H, W) f32, w: (Cout, Cin, 3, 3, 3)."""
    # TODO(synk): only kernel=3 and norm='IN' are implemented (module defaults);
    # BatchNorm3d ('BN') with running stats is not translated.
    bsz, cin, d, h, wd = x.shape
    cout = w.shape[0]
    do, ho, wo = (d + 1) // 2, (h + 1) // 2, (wd + 1) // 2
    row, plane = wo + 1, (ho + 1) * (wo + 1)
    mp0 = (do + 1) * plane                     # natural flat phase length

    cin_pad = _round_up(cin, 16)               # bf16 sublane tile
    cout_pad = _round_up(cout, 8)              # f32 sublane tile
    mout = _round_up(do * plane, 128)          # lane-dense output width
    max_shift = plane + row + 1
    mp = _round_up(mout + max_shift, 128)      # lane-dense phase width

    # Cast to bf16 BEFORE the pad/transpose passes (halves wrapper HBM traffic).
    xb = x.astype(jnp.bfloat16)

    # Pad every spatial axis to 2*(out+1): left pad 1 is the conv padding; the
    # extra right padding is only read by masked-out output positions.
    pads = ((0, 0), (0, 0),
            (1, 2 * (do + 1) - 1 - d),
            (1, 2 * (ho + 1) - 1 - h),
            (1, 2 * (wo + 1) - 1 - wd))
    xp = jnp.pad(xb, pads)

    # Parity-phase decomposition: stride-2 taps become {0,1}^3 offsets on 8
    # half-resolution volumes.  Pure layout change, no data blow-up.
    xp = xp.reshape(bsz, cin, do + 1, 2, ho + 1, 2, wo + 1, 2)
    xp = jnp.transpose(xp, (0, 3, 5, 7, 1, 2, 4, 6))        # (B,2,2,2,Cin,D',H',W')
    xp = xp.reshape(bsz, 8, cin, mp0)
    xp = jnp.pad(xp, ((0, 0), (0, 0), (0, cin_pad - cin), (0, mp - mp0)))

    # im2col weights: W2[co, t*cin_pad + ci] = w[co, ci, kd, kh, kw].
    w27 = jnp.transpose(w, (0, 2, 3, 4, 1)).reshape(cout, 27, cin)
    w27 = jnp.pad(w27, ((0, cout_pad - cout), (0, 0), (0, cin_pad - cin)))
    w2d = w27.reshape(cout_pad, 27 * cin_pad).astype(jnp.bfloat16)

    # Per-tap (phase, flat shift); flat index uses the padded (do+1,ho+1,wo+1)
    # strides so every tap is one static lane slice.  t = kd*9 + kh*3 + kw.
    taps = tuple(((kd % 2) * 4 + (kh % 2) * 2 + (kw % 2),
                  (kd // 2) * plane + (kh // 2) * row + (kw // 2))
                 for kd in range(3) for kh in range(3) for kw in range(3))

    # Validity mask over the lane-padded flat output axis (tiny, stays VMEM
    # resident since its block index never changes).
    m_idx = jnp.arange(mout, dtype=jnp.int32)
    valid = ((m_idx < do * plane)
             & (((m_idx % plane) // row) < ho)
             & ((m_idx % row) < wo))
    mask = valid.astype(jnp.float32).reshape(1, mout)

    # Real per-step VMEM working set: double-buffered x/out blocks, (constant)
    # weight+mask buffers, im2col scratch, f32 matmul result + norm temps.
    x_blk = 8 * cin_pad * mp * 2
    o_blk = cout_pad * mout * 4
    const_blk = cout_pad * 27 * cin_pad * 2 + mout * 4
    col_blk = 27 * cin_pad * mout * 2
    vmem_needed = 2 * x_blk + 2 * o_blk + 2 * const_blk + col_blk + 2 * o_blk
    # TODO(synk): for volumes whose per-batch working set exceeds this budget
    # (v7x: 64 MiB physical VMEM), tile the output-depth axis (1-plane halo)
    # and/or add a parallel Cout-tile grid axis instead of asserting.
    assert vmem_needed < 40 * 1024 * 1024, "volume too large for single-block kernel"
    vmem_limit = min(max(int(1.5 * vmem_needed), 16 * 1024 * 1024),
                     48 * 1024 * 1024)

    kernel = functools.partial(
        _downsample_kernel, taps=taps, cin_pad=cin_pad, count=do * ho * wo,
        apply_norm=apply_norm, apply_act=apply_act,
        eps=eps, negative_slope=negative_slope)

    out = pl.pallas_call(
        kernel,
        out_shape=jax.ShapeDtypeStruct((bsz, cout_pad, mout), jnp.float32),
        grid=(bsz,),
        in_specs=[
            pl.BlockSpec((1, 8, cin_pad, mp), lambda b: (b, 0, 0, 0)),
            pl.BlockSpec((cout_pad, 27 * cin_pad), lambda b: (0, 0)),
            pl.BlockSpec((1, mout), lambda b: (0, 0)),
        ],
        out_specs=pl.BlockSpec((1, cout_pad, mout), lambda b: (b, 0, 0)),
        scratch_shapes=[pltpu.VMEM((27 * cin_pad, mout), jnp.bfloat16)],
        compiler_params=pltpu.CompilerParams(
            dimension_semantics=("parallel",),
            vmem_limit_bytes=vmem_limit),
    )(xp, w2d, mask)

    # Pure slice + reshape unpack (no pad copy on the output path).
    out = out[:, :cout, :do * plane].reshape(bsz, cout, do, ho + 1, wo + 1)
    return out[:, :, :, :ho, :wo]


# ------------------------------ pure-JAX reference ---------------------------

def downsample_reference(w, x, eps=1e-5, negative_slope=0.2):
    y = jax.lax.conv_general_dilated(
        x, w, window_strides=(2, 2, 2),
        padding=((1, 1), (1, 1), (1, 1)),
        dimension_numbers=("NCDHW", "OIDHW", "NCDHW"),
        precision=jax.lax.Precision.HIGHEST)
    mean = jnp.mean(y, axis=(2, 3, 4), keepdims=True)
    var = jnp.mean((y - mean) ** 2, axis=(2, 3, 4), keepdims=True)
    y = (y - mean) * jax.lax.rsqrt(var + eps)
    return jnp.where(y >= 0, y, negative_slope * y)


# ----------------------------------- main ------------------------------------

if __name__ == "__main__":
    bsz, cin, cout = 2, 4, 8
    d = h = wd = 16

    key = jax.random.PRNGKey(0)
    kx, kw = jax.random.split(key)
    x = jax.random.normal(kx, (bsz, cin, d, h, wd), jnp.float32)
    std = math.sqrt(2.0 / (cin * 27))                     # kaiming_normal_ (fan_in)
    w = jax.random.normal(kw, (cout, cin, 3, 3, 3), jnp.float32) * std

    fwd = jax.jit(downsample_forward)
    out = fwd(w, x)
    jax.block_until_ready(out)

    assert out.shape == (bsz, cout, d // 2, h // 2, wd // 2)
    assert bool(jnp.all(jnp.isfinite(out)))

    ref = downsample_reference(w, x)
    err = float(jnp.max(jnp.abs(out - ref)))
    assert err < 5e-2, f"max abs error vs reference: {err}"

    print("KERNEL_OK")
</pallas_src>

<mosaic_0001>
module attributes {stable_mosaic.version = 11 : i64} {
  func.func @_downsample_kernel(%arg0: i32, %arg1: memref<1x8x16x896xbf16, #tpu.memory_space<vmem>>, %arg2: memref<8x432xbf16, #tpu.memory_space<vmem>>, %arg3: memref<1x768xf32, #tpu.memory_space<vmem>>, %arg4: memref<1x8x768xf32, #tpu.memory_space<vmem>>, %arg5: memref<432x768xbf16, #tpu.memory_space<vmem>>) attributes {dimension_semantics = [#tpu.dimension_semantics<parallel>], iteration_bounds = array<i64: 2>, scalar_prefetch = 0 : i64, scratch_operands = 1 : i64, tpu.core_type = #tpu.core_type<tc>, window_params = [{transform_indices = @transform_0, window_bounds = array<i64: 1, 8, 16, 896>}, {pipeline_mode = #tpu.pipeline_mode<synchronous>, transform_indices = @transform_1, window_bounds = array<i64: 8, 432>}, {pipeline_mode = #tpu.pipeline_mode<synchronous>, transform_indices = @transform_2, window_bounds = array<i64: 1, 768>}, {transform_indices = @transform_3, window_bounds = array<i64: 1, 8, 768>}]} {
    %c0 = arith.constant 0 : index
    %c0_0 = arith.constant 0 : index
    %c0_1 = arith.constant 0 : index
    %c0_2 = arith.constant 0 : index
    %0 = vector.load %arg1[%c0, %c0_0, %c0_1, %c0_2] : memref<1x8x16x896xbf16, #tpu.memory_space<vmem>>, vector<1x1x16x768xbf16>
    %1 = vector.shape_cast %0 : vector<1x1x16x768xbf16> to vector<16x768xbf16>
    %c0_3 = arith.constant 0 : index
    %c0_4 = arith.constant 0 : index
    %2 = vector.load %arg5[%c0_3, %c0_4] : memref<432x768xbf16, #tpu.memory_space<vmem>>, vector<16x768xbf16>
    tpu.vector_store %arg5[%c0_3, %c0_4], %1 {strides = array<i32>} : memref<432x768xbf16, #tpu.memory_space<vmem>>, vector<16x768xbf16>,
    %c0_5 = arith.constant 0 : index
    %c1 = arith.constant 1 : index
    %c0_6 = arith.constant 0 : index
    %c0_7 = arith.constant 0 : index
    %3 = vector.load %arg1[%c0_5, %c1, %c0_6, %c0_7] : memref<1x8x16x896xbf16, #tpu.memory_space<vmem>>, vector<1x1x16x768xbf16>
    %4 = vector.shape_cast %3 : vector<1x1x16x768xbf16> to vector<16x768xbf16>
    %c16 = arith.constant 16 : index
    %c0_8 = arith.constant 0 : index
    %5 = vector.load %arg5[%c16, %c0_8] : memref<432x768xbf16, #tpu.memory_space<vmem>>, vector<16x768xbf16>
    tpu.vector_store %arg5[%c16, %c0_8], %4 {strides = array<i32>} : memref<432x768xbf16, #tpu.memory_space<vmem>>, vector<16x768xbf16>,
    %c0_9 = arith.constant 0 : index
    %c0_10 = arith.constant 0 : index
    %c0_11 = arith.constant 0 : index
    %c1_12 = arith.constant 1 : index
    %6 = vector.load %arg1[%c0_9, %c0_10, %c0_11, %c1_12] : memref<1x8x16x896xbf16, #tpu.memory_space<vmem>>, vector<1x1x16x768xbf16>
    %7 = vector.shape_cast %6 : vector<1x1x16x768xbf16> to vector<16x768xbf16>
    %c32 = arith.constant 32 : index
    %c0_13 = arith.constant 0 : index
    %8 = vector.load %arg5[%c32, %c0_13] : memref<432x768xbf16, #tpu.memory_space<vmem>>, vector<16x768xbf16>
    tpu.vector_store %arg5[%c32, %c0_13], %7 {strides = array<i32>} : memref<432x768xbf16, #tpu.memory_space<vmem>>, vector<16x768xbf16>,
    %c0_14 = arith.constant 0 : index
    %c2 = arith.constant 2 : index
    %c0_15 = arith.constant 0 : index
    %c0_16 = arith.constant 0 : index
    %9 = vector.load %arg1[%c0_14, %c2, %c0_15, %c0_16] : memref<1x8x16x896xbf16, #tpu.memory_space<vmem>>, vector<1x1x16x768xbf16>
    %10 = vector.shape_cast %9 : vector<1x1x16x768xbf16> to vector<16x768xbf16>
    %c48 = arith.constant 48 : index
    %c0_17 = arith.constant 0 : index
    %11 = vector.load %arg5[%c48, %c0_17] : memref<432x768xbf16, #tpu.memory_space<vmem>>, vector<16x768xbf16>
    tpu.vector_store %arg5[%c48, %c0_17], %10 {strides = array<i32>} : memref<432x768xbf16, #tpu.memory_space<vmem>>, vector<16x768xbf16>,
    %c0_18 = arith.constant 0 : index
    %c3 = arith.constant 3 : index
    %c0_19 = arith.constant 0 : index
    %c0_20 = arith.constant 0 : index
    %12 = vector.load %arg1[%c0_18, %c3, %c0_19, %c0_20] : memref<1x8x16x896xbf16, #tpu.memory_space<vmem>>, vector<1x1x16x768xbf16>
    %13 = vector.shape_cast %12 : vector<1x1x16x768xbf16> to vector<16x768xbf16>
    %c64 = arith.constant 64 : index
    %c0_21 = arith.constant 0 : index
    %14 = vector.load %arg5[%c64, %c0_21] : memref<432x768xbf16, #tpu.memory_space<vmem>>, vector<16x768xbf16>
    tpu.vector_store %arg5[%c64, %c0_21], %13 {strides = array<i32>} : memref<432x768xbf16, #tpu.memory_space<vmem>>, vector<16x768xbf16>,
    %c0_22 = arith.constant 0 : index
    %c2_23 = arith.constant 2 : index
    %c0_24 = arith.constant 0 : index
    %c1_25 = arith.constant 1 : index
    %15 = vector.load %arg1[%c0_22, %c2_23, %c0_24, %c1_25] : memref<1x8x16x896xbf16, #tpu.memory_space<vmem>>, vector<1x1x16x768xbf16>
    %16 = vector.shape_cast %15 : vector<1x1x16x768xbf16> to vector<16x768xbf16>
    %c80 = arith.constant 80 : index
    %c0_26 = arith.constant 0 : index
    %17 = vector.load %arg5[%c80, %c0_26] : memref<432x768xbf16, #tpu.memory_space<vmem>>, vector<16x768xbf16>
    tpu.vector_store %arg5[%c80, %c0_26], %16 {strides = array<i32>} : memref<432x768xbf16, #tpu.memory_space<vmem>>, vector<16x768xbf16>,
    %c0_27 = arith.constant 0 : index
    %c0_28 = arith.constant 0 : index
    %c0_29 = arith.constant 0 : index
    %c9 = arith.constant 9 : index
    %18 = vector.load %arg1[%c0_27, %c0_28, %c0_29, %c9] : memref<1x8x16x896xbf16, #tpu.memory_space<vmem>>, vector<1x1x16x768xbf16>
    %19 = vector.shape_cast %18 : vector<1x1x16x768xbf16> to vector<16x768xbf16>
    %c96 = arith.constant 96 : index
    %c0_30 = arith.constant 0 : index
    %20 = vector.load %arg5[%c96, %c0_30] : memref<432x768xbf16, #tpu.memory_space<vmem>>, vector<16x768xbf16>
    tpu.vector_store %arg5[%c96, %c0_30], %19 {strides = array<i32>} : memref<432x768xbf16, #tpu.memory_space<vmem>>, vector<16x768xbf16>,
    %c0_31 = arith.constant 0 : index
    %c1_32 = arith.constant 1 : index
    %c0_33 = arith.constant 0 : index
    %c9_34 = arith.constant 9 : index
    %21 = vector.load %arg1[%c0_31, %c1_32, %c0_33, %c9_34] : memref<1x8x16x896xbf16, #tpu.memory_space<vmem>>, vector<1x1x16x768xbf16>
    %22 = vector.shape_cast %21 : vector<1x1x16x768xbf16> to vector<16x768xbf16>
    %c112 = arith.constant 112 : index
    %c0_35 = arith.constant 0 : index
    %23 = vector.load %arg5[%c112, %c0_35] : memref<432x768xbf16, #tpu.memory_space<vmem>>, vector<16x768xbf16>
    tpu.vector_store %arg5[%c112, %c0_35], %22 {strides = array<i32>} : memref<432x768xbf16, #tpu.memory_space<vmem>>, vector<16x768xbf16>,
    %c0_36 = arith.constant 0 : index
    %c0_37 = arith.constant 0 : index
    %c0_38 = arith.constant 0 : index
    %c10 = arith.constant 10 : index
    %24 = vector.load %arg1[%c0_36, %c0_37, %c0_38, %c10] : memref<1x8x16x896xbf16, #tpu.memory_space<vmem>>, vector<1x1x16x768xbf16>
    %25 = vector.shape_cast %24 : vector<1x1x16x768xbf16> to vector<16x768xbf16>
    %c128 = arith.constant 128 : index
    %c0_39 = arith.constant 0 : index
    %26 = vector.load %arg5[%c128, %c0_39] : memref<432x768xbf16, #tpu.memory_space<vmem>>, vector<16x768xbf16>
    tpu.vector_store %arg5[%c128, %c0_39], %25 {strides = array<i32>} : memref<432x768xbf16, #tpu.memory_space<vmem>>, vector<16x768xbf16>,
    %c0_40 = arith.constant 0 : index
    %c4 = arith.constant 4 : index
    %c0_41 = arith.constant 0 : index
    %c0_42 = arith.constant 0 : index
    %27 = vector.load %arg1[%c0_40, %c4, %c0_41, %c0_42] : memref<1x8x16x896xbf16, #tpu.memory_space<vmem>>, vector<1x1x16x768xbf16>
    %28 = vector.shape_cast %27 : vector<1x1x16x768xbf16> to vector<16x768xbf16>
    %c144 = arith.constant 144 : index
    %c0_43 = arith.constant 0 : index
    %29 = vector.load %arg5[%c144, %c0_43] : memref<432x768xbf16, #tpu.memory_space<vmem>>, vector<16x768xbf16>
    tpu.vector_store %arg5[%c144, %c0_43], %28 {strides = array<i32>} : memref<432x768xbf16, #tpu.memory_space<vmem>>, vector<16x768xbf16>,
    %c0_44 = arith.constant 0 : index
    %c5 = arith.constant 5 : index
    %c0_45 = arith.constant 0 : index
    %c0_46 = arith.constant 0 : index
    %30 = vector.load %arg1[%c0_44, %c5, %c0_45, %c0_46] : memref<1x8x16x896xbf16, #tpu.memory_space<vmem>>, vector<1x1x16x768xbf16>
    %31 = vector.shape_cast %30 : vector<1x1x16x768xbf16> to vector<16x768xbf16>
    %c160 = arith.constant 160 : index
    %c0_47 = arith.constant 0 : index
    %32 = vector.load %arg5[%c160, %c0_47] : memref<432x768xbf16, #tpu.memory_space<vmem>>, vector<16x768xbf16>
    tpu.vector_store %arg5[%c160, %c0_47], %31 {strides = array<i32>} : memref<432x768xbf16, #tpu.memory_space<vmem>>, vector<16x768xbf16>,
    %c0_48 = arith.constant 0 : index
    %c4_49 = arith.constant 4 : index
    %c0_50 = arith.constant 0 : index
    %c1_51 = arith.constant 1 : index
    %33 = vector.load %arg1[%c0_48, %c4_49, %c0_50, %c1_51] : memref<1x8x16x896xbf16, #tpu.memory_space<vmem>>, vector<1x1x16x768xbf16>
    %34 = vector.shape_cast %33 : vector<1x1x16x768xbf16> to vector<16x768xbf16>
    %c176 = arith.constant 176 : index
    %c0_52 = arith.constant 0 : index
    %35 = vector.load %arg5[%c176, %c0_52] : memref<432x768xbf16, #tpu.memory_space<vmem>>, vector<16x768xbf16>
    tpu.vector_store %arg5[%c176, %c0_52], %34 {strides = array<i32>} : memref<432x768xbf16, #tpu.memory_space<vmem>>, vector<16x768xbf16>,
    %c0_53 = arith.constant 0 : index
    %c6 = arith.constant 6 : index
    %c0_54 = arith.constant 0 : index
    %c0_55 = arith.constant 0 : index
    %36 = vector.load %arg1[%c0_53, %c6, %c0_54, %c0_55] : memref<1x8x16x896xbf16, #tpu.memory_space<vmem>>, vector<1x1x16x768xbf16>
    %37 = vector.shape_cast %36 : vector<1x1x16x768xbf16> to vector<16x768xbf16>
    %c192 = arith.constant 192 : index
    %c0_56 = arith.constant 0 : index
    %38 = vector.load %arg5[%c192, %c0_56] : memref<432x768xbf16, #tpu.memory_space<vmem>>, vector<16x768xbf16>
    tpu.vector_store %arg5[%c192, %c0_56], %37 {strides = array<i32>} : memref<432x768xbf16, #tpu.memory_space<vmem>>, vector<16x768xbf16>,
    %c0_57 = arith.constant 0 : index
    %c7 = arith.constant 7 : index
    %c0_58 = arith.constant 0 : index
    %c0_59 = arith.constant 0 : index
    %39 = vector.load %arg1[%c0_57, %c7, %c0_58, %c0_59] : memref<1x8x16x896xbf16, #tpu.memory_space<vmem>>, vector<1x1x16x768xbf16>
    %40 = vector.shape_cast %39 : vector<1x1x16x768xbf16> to vector<16x768xbf16>
    %c208 = arith.constant 208 : index
    %c0_60 = arith.constant 0 : index
    %41 = vector.load %arg5[%c208, %c0_60] : memref<432x768xbf16, #tpu.memory_space<vmem>>, vector<16x768xbf16>
    tpu.vector_store %arg5[%c208, %c0_60], %40 {strides = array<i32>} : memref<432x768xbf16, #tpu.memory_space<vmem>>, vector<16x768xbf16>,
    %c0_61 = arith.constant 0 : index
    %c6_62 = arith.constant 6 : index
    %c0_63 = arith.constant 0 : index
    %c1_64 = arith.constant 1 : index
    %42 = vector.load %arg1[%c0_61, %c6_62, %c0_63, %c1_64] : memref<1x8x16x896xbf16, #tpu.memory_space<vmem>>, vector<1x1x16x768xbf16>
    %43 = vector.shape_cast %42 : vector<1x1x16x768xbf16> to vector<16x768xbf16>
    %c224 = arith.constant 224 : index
    %c0_65 = arith.constant 0 : index
    %44 = vector.load %arg5[%c224, %c0_65] : memref<432x768xbf16, #tpu.memory_space<vmem>>, vector<16x768xbf16>
    tpu.vector_store %arg5[%c224, %c0_65], %43 {strides = array<i32>} : memref<432x768xbf16, #tpu.memory_space<vmem>>, vector<16x768xbf16>,
    %c0_66 = arith.constant 0 : index
    %c4_67 = arith.constant 4 : index
    %c0_68 = arith.constant 0 : index
    %c9_69 = arith.constant 9 : index
    %45 = vector.load %arg1[%c0_66, %c4_67, %c0_68, %c9_69] : memref<1x8x16x896xbf16, #tpu.memory_space<vmem>>, vector<1x1x16x768xbf16>
    %46 = vector.shape_cast %45 : vector<1x1x16x768xbf16> to vector<16x768xbf16>
    %c240 = arith.constant 240 : index
    %c0_70 = arith.constant 0 : index
    %47 = vector.load %arg5[%c240, %c0_70] : memref<432x768xbf16, #tpu.memory_space<vmem>>, vector<16x768xbf16>
    tpu.vector_store %arg5[%c240, %c0_70], %46 {strides = array<i32>} : memref<432x768xbf16, #tpu.memory_space<vmem>>, vector<16x768xbf16>,
    %c0_71 = arith.constant 0 : index
    %c5_72 = arith.constant 5 : index
    %c0_73 = arith.constant 0 : index
    %c9_74 = arith.constant 9 : index
    %48 = vector.load %arg1[%c0_71, %c5_72, %c0_73, %c9_74] : memref<1x8x16x896xbf16, #tpu.memory_space<vmem>>, vector<1x1x16x768xbf16>
    %49 = vector.shape_cast %48 : vector<1x1x16x768xbf16> to vector<16x768xbf16>
    %c256 = arith.constant 256 : index
    %c0_75 = arith.constant 0 : index
    %50 = vector.load %arg5[%c256, %c0_75] : memref<432x768xbf16, #tpu.memory_space<vmem>>, vector<16x768xbf16>
    tpu.vector_store %arg5[%c256, %c0_75], %49 {strides = array<i32>} : memref<432x768xbf16, #tpu.memory_space<vmem>>, vector<16x768xbf16>,
    %c0_76 = arith.constant 0 : index
    %c4_77 = arith.constant 4 : index
    %c0_78 = arith.constant 0 : index
    %c10_79 = arith.constant 10 : index
    %51 = vector.load %arg1[%c0_76, %c4_77, %c0_78, %c10_79] : memref<1x8x16x896xbf16, #tpu.memory_space<vmem>>, vector<1x1x16x768xbf16>
    %52 = vector.shape_cast %51 : vector<1x1x16x768xbf16> to vector<16x768xbf16>
    %c272 = arith.constant 272 : index
    %c0_80 = arith.constant 0 : index
    %53 = vector.load %arg5[%c272, %c0_80] : memref<432x768xbf16, #tpu.memory_space<vmem>>, vector<16x768xbf16>
    tpu.vector_store %arg5[%c272, %c0_80], %52 {strides = array<i32>} : memref<432x768xbf16, #tpu.memory_space<vmem>>, vector<16x768xbf16>,
    %c0_81 = arith.constant 0 : index
    %c0_82 = arith.constant 0 : index
    %c0_83 = arith.constant 0 : index
    %c81 = arith.constant 81 : index
    %54 = vector.load %arg1[%c0_81, %c0_82, %c0_83, %c81] : memref<1x8x16x896xbf16, #tpu.memory_space<vmem>>, vector<1x1x16x768xbf16>
    %55 = vector.shape_cast %54 : vector<1x1x16x768xbf16> to vector<16x768xbf16>
    %c288 = arith.constant 288 : index
    %c0_84 = arith.constant 0 : index
    %56 = vector.load %arg5[%c288, %c0_84] : memref<432x768xbf16, #tpu.memory_space<vmem>>, vector<16x768xbf16>
    tpu.vector_store %arg5[%c288, %c0_84], %55 {strides = array<i32>} : memref<432x768xbf16, #tpu.memory_space<vmem>>, vector<16x768xbf16>,
    %c0_85 = arith.constant 0 : index
    %c1_86 = arith.constant 1 : index
    %c0_87 = arith.constant 0 : index
    %c81_88 = arith.constant 81 : index
    %57 = vector.load %arg1[%c0_85, %c1_86, %c0_87, %c81_88] : memref<1x8x16x896xbf16, #tpu.memory_space<vmem>>, vector<1x1x16x768xbf16>
    %58 = vector.shape_cast %57 : vector<1x1x16x768xbf16> to vector<16x768xbf16>
    %c304 = arith.constant 304 : index
    %c0_89 = arith.constant 0 : index
    %59 = vector.load %arg5[%c304, %c0_89] : memref<432x768xbf16, #tpu.memory_space<vmem>>, vector<16x768xbf16>
    tpu.vector_store %arg5[%c304, %c0_89], %58 {strides = array<i32>} : memref<432x768xbf16, #tpu.memory_space<vmem>>, vector<16x768xbf16>,
    %c0_90 = arith.constant 0 : index
    %c0_91 = arith.constant 0 : index
    %c0_92 = arith.constant 0 : index
    %c82 = arith.constant 82 : index
    %60 = vector.load %arg1[%c0_90, %c0_91, %c0_92, %c82] : memref<1x8x16x896xbf16, #tpu.memory_space<vmem>>, vector<1x1x16x768xbf16>
    %61 = vector.shape_cast %60 : vector<1x1x16x768xbf16> to vector<16x768xbf16>
    %c320 = arith.constant 320 : index
    %c0_93 = arith.constant 0 : index
    %62 = vector.load %arg5[%c320, %c0_93] : memref<432x768xbf16, #tpu.memory_space<vmem>>, vector<16x768xbf16>
    tpu.vector_store %arg5[%c320, %c0_93], %61 {strides = array<i32>} : memref<432x768xbf16, #tpu.memory_space<vmem>>, vector<16x768xbf16>,
    %c0_94 = arith.constant 0 : index
    %c2_95 = arith.constant 2 : index
    %c0_96 = arith.constant 0 : index
    %c81_97 = arith.constant 81 : index
    %63 = vector.load %arg1[%c0_94, %c2_95, %c0_96, %c81_97] : memref<1x8x16x896xbf16, #tpu.memory_space<vmem>>, vector<1x1x16x768xbf16>
    %64 = vector.shape_cast %63 : vector<1x1x16x768xbf16> to vector<16x768xbf16>
    %c336 = arith.constant 336 : index
    %c0_98 = arith.constant 0 : index
    %65 = vector.load %arg5[%c336, %c0_98] : memref<432x768xbf16, #tpu.memory_space<vmem>>, vector<16x768xbf16>
    tpu.vector_store %arg5[%c336, %c0_98], %64 {strides = array<i32>} : memref<432x768xbf16, #tpu.memory_space<vmem>>, vector<16x768xbf16>,
    %c0_99 = arith.constant 0 : index
    %c3_100 = arith.constant 3 : index
    %c0_101 = arith.constant 0 : index
    %c81_102 = arith.constant 81 : index
    %66 = vector.load %arg1[%c0_99, %c3_100, %c0_101, %c81_102] : memref<1x8x16x896xbf16, #tpu.memory_space<vmem>>, vector<1x1x16x768xbf16>
    %67 = vector.shape_cast %66 : vector<1x1x16x768xbf16> to vector<16x768xbf16>
    %c352 = arith.constant 352 : index
    %c0_103 = arith.constant 0 : index
    %68 = vector.load %arg5[%c352, %c0_103] : memref<432x768xbf16, #tpu.memory_space<vmem>>, vector<16x768xbf16>
    tpu.vector_store %arg5[%c352, %c0_103], %67 {strides = array<i32>} : memref<432x768xbf16, #tpu.memory_space<vmem>>, vector<16x768xbf16>,
    %c0_104 = arith.constant 0 : index
    %c2_105 = arith.constant 2 : index
    %c0_106 = arith.constant 0 : index
    %c82_107 = arith.constant 82 : index
    %69 = vector.load %arg1[%c0_104, %c2_105, %c0_106, %c82_107] : memref<1x8x16x896xbf16, #tpu.memory_space<vmem>>, vector<1x1x16x768xbf16>
    %70 = vector.shape_cast %69 : vector<1x1x16x768xbf16> to vector<16x768xbf16>
    %c368 = arith.constant 368 : index
    %c0_108 = arith.constant 0 : index
    %71 = vector.load %arg5[%c368, %c0_108] : memref<432x768xbf16, #tpu.memory_space<vmem>>, vector<16x768xbf16>
    tpu.vector_store %arg5[%c368, %c0_108], %70 {strides = array<i32>} : memref<432x768xbf16, #tpu.memory_space<vmem>>, vector<16x768xbf16>,
    %c0_109 = arith.constant 0 : index
    %c0_110 = arith.constant 0 : index
    %c0_111 = arith.constant 0 : index
    %c90 = arith.constant 90 : index
    %72 = vector.load %arg1[%c0_109, %c0_110, %c0_111, %c90] : memref<1x8x16x896xbf16, #tpu.memory_space<vmem>>, vector<1x1x16x768xbf16>
    %73 = vector.shape_cast %72 : vector<1x1x16x768xbf16> to vector<16x768xbf16>
    %c384 = arith.constant 384 : index
    %c0_112 = arith.constant 0 : index
    %74 = vector.load %arg5[%c384, %c0_112] : memref<432x768xbf16, #tpu.memory_space<vmem>>, vector<16x768xbf16>
    tpu.vector_store %arg5[%c384, %c0_112], %73 {strides = array<i32>} : memref<432x768xbf16, #tpu.memory_space<vmem>>, vector<16x768xbf16>,
    %c0_113 = arith.constant 0 : index
    %c1_114 = arith.constant 1 : index
    %c0_115 = arith.constant 0 : index
    %c90_116 = arith.constant 90 : index
    %75 = vector.load %arg1[%c0_113, %c1_114, %c0_115, %c90_116] : memref<1x8x16x896xbf16, #tpu.memory_space<vmem>>, vector<1x1x16x768xbf16>
    %76 = vector.shape_cast %75 : vector<1x1x16x768xbf16> to vector<16x768xbf16>
    %c400 = arith.constant 400 : index
    %c0_117 = arith.constant 0 : index
    %77 = vector.load %arg5[%c400, %c0_117] : memref<432x768xbf16, #tpu.memory_space<vmem>>, vector<16x768xbf16>
    tpu.vector_store %arg5[%c400, %c0_117], %76 {strides = array<i32>} : memref<432x768xbf16, #tpu.memory_space<vmem>>, vector<16x768xbf16>,
    %c0_118 = arith.constant 0 : index
    %c0_119 = arith.constant 0 : index
    %c0_120 = arith.constant 0 : index
    %c91 = arith.constant 91 : index
    %78 = vector.load %arg1[%c0_118, %c0_119, %c0_120, %c91] : memref<1x8x16x896xbf16, #tpu.memory_space<vmem>>, vector<1x1x16x768xbf16>
    %79 = vector.shape_cast %78 : vector<1x1x16x768xbf16> to vector<16x768xbf16>
    %c416 = arith.constant 416 : index
    %c0_121 = arith.constant 0 : index
    %80 = vector.load %arg5[%c416, %c0_121] : memref<432x768xbf16, #tpu.memory_space<vmem>>, vector<16x768xbf16>
    tpu.vector_store %arg5[%c416, %c0_121], %79 {strides = array<i32>} : memref<432x768xbf16, #tpu.memory_space<vmem>>, vector<16x768xbf16>,
    %c0_122 = arith.constant 0 : index
    %c0_123 = arith.constant 0 : index
    %81 = vector.load %arg2[%c0_122, %c0_123] : memref<8x432xbf16, #tpu.memory_space<vmem>>, vector<8x432xbf16>
    %c0_124 = arith.constant 0 : index
    %c0_125 = arith.constant 0 : index
    %82 = vector.load %arg5[%c0_124, %c0_125] : memref<432x768xbf16, #tpu.memory_space<vmem>>, vector<432x768xbf16>
    %cst = arith.constant dense<0.000000e+00> : vector<8x768xf32>
    %83 = tpu.matmul %81, %82, %cst {dimension_numbers = #tpu.dot_dimension_numbers<[1], [0], [0], [1], [0, 0, 1, 1], [], []>} : vector<8x432xbf16>, vector<432x768xbf16>, vector<8x768xf32> -> vector<8x768xf32>
    %c0_126 = arith.constant 0 : index
    %c0_127 = arith.constant 0 : index
    %84 = vector.load %arg3[%c0_126, %c0_127] : memref<1x768xf32, #tpu.memory_space<vmem>>, vector<1x768xf32>
    %85 = vector.broadcast %84 : vector<1x768xf32> to vector<8x768xf32>
    %86 = arith.mulf %83, %85 : vector<8x768xf32>
    %cst_128 = arith.constant dense<0.000000e+00> : vector<8xf32>
    %87 = vector.multi_reduction <add>, %86, %cst_128 [1] : vector<8x768xf32> to vector<8xf32>
    %88 = vector.shape_cast %87 : vector<8xf32> to vector<8x1xf32>
    %cst_129 = arith.constant 0.001953125 : f32
    %89 = vector.broadcast %cst_129 : f32 to vector<8x1xf32>
    %90 = arith.mulf %88, %89 : vector<8x1xf32>
    %91 = vector.broadcast %90 : vector<8x1xf32> to vector<8x768xf32>
    %92 = arith.subf %83, %91 : vector<8x768xf32>
    %93 = vector.broadcast %84 : vector<1x768xf32> to vector<8x768xf32>
    %94 = arith.mulf %92, %93 : vector<8x768xf32>
    %95 = arith.mulf %94, %94 : vector<8x768xf32>
    %cst_130 = arith.constant dense<0.000000e+00> : vector<8xf32>
    %96 = vector.multi_reduction <add>, %95, %cst_130 [1] : vector<8x768xf32> to vector<8xf32>
    %97 = vector.shape_cast %96 : vector<8xf32> to vector<8x1xf32>
    %cst_131 = arith.constant 0.001953125 : f32
    %98 = vector.broadcast %cst_131 : f32 to vector<8x1xf32>
    %99 = arith.mulf %97, %98 : vector<8x1xf32>
    %cst_132 = arith.constant 9.99999974E-6 : f32
    %100 = vector.broadcast %cst_132 : f32 to vector<8x1xf32>
    %101 = arith.addf %99, %100 : vector<8x1xf32>
    %102 = math.rsqrt %101 : vector<8x1xf32>
    %103 = vector.broadcast %102 : vector<8x1xf32> to vector<8x768xf32>
    %104 = arith.mulf %94, %103 : vector<8x768xf32>
    %cst_133 = arith.constant 0.000000e+00 : f32
    %105 = vector.broadcast %cst_133 : f32 to vector<8x768xf32>
    %106 = arith.cmpf oge, %104, %105 : vector<8x768xf32>
    %cst_134 = arith.constant 2.000000e-01 : f32
    %107 = vector.broadcast %cst_134 : f32 to vector<8x768xf32>
    %108 = arith.mulf %107, %104 : vector<8x768xf32>
    %109 = arith.select %106, %104, %108 : vector<8x768xi1>, vector<8x768xf32>
    %c0_135 = arith.constant 0 : index
    %c0_136 = arith.constant 0 : index
    %c0_137 = arith.constant 0 : index
    %110 = vector.load %arg4[%c0_135, %c0_136, %c0_137] : memref<1x8x768xf32, #tpu.memory_space<vmem>>, vector<1x8x768xf32>
    %111 = vector.shape_cast %110 : vector<1x8x768xf32> to vector<8x768xf32>
    %112 = vector.shape_cast %109 : vector<8x768xf32> to vector<1x8x768xf32>
    tpu.vector_store %arg4[%c0_135, %c0_136, %c0_137], %112 {strides = array<i32>} : memref<1x8x768xf32, #tpu.memory_space<vmem>>, vector<1x8x768xf32>,
    return
  }
  func.func @transform_0(%arg0: i32) -> (i32, i32, i32, i32) {
    %c0_i32 = arith.constant 0 : i32
    %c0_i32_0 = arith.constant 0 : i32
    %c0_i32_1 = arith.constant 0 : i32
    %c0_i32_2 = arith.constant 0 : i32
    return %arg0, %c0_i32, %c0_i32_0, %c0_i32_1 : i32, i32, i32, i32
  }
  func.func @transform_1(%arg0: i32) -> (i32, i32) {
    %c0_i32 = arith.constant 0 : i32
    %c0_i32_0 = arith.constant 0 : i32
    %c0_i32_1 = arith.constant 0 : i32
    return %c0_i32, %c0_i32_0 : i32, i32
  }
  func.func @transform_2(%arg0: i32) -> (i32, i32) {
    %c0_i32 = arith.constant 0 : i32
    %c0_i32_0 = arith.constant 0 : i32
    %c0_i32_1 = arith.constant 0 : i32
    return %c0_i32, %c0_i32_0 : i32, i32
  }
  func.func @transform_3(%arg0: i32) -> (i32, i32, i32) {
    %c0_i32 = arith.constant 0 : i32
    %c0_i32_0 = arith.constant 0 : i32
    %c0_i32_1 = arith.constant 0 : i32
    return %arg0, %c0_i32, %c0_i32_0 : i32, i32, i32
  }
}

</mosaic_0001>

<llo_original>
// kernel: downsample_forward.1
$region0: #{downsample_forward.1}
  #allocation0 [shape = 'u32[]', space=smem, size = 0x4, offset = 0x4, fixed_abs, tag = 'smem constant byte address 0x4 - core index']
  #allocation1 [shape = 'u32[144,128]{1,0:T(1,128)}', space=vmem, size = 0x12000, scoped, tag = 'internal scratch']
  #allocation2 [shape = 'bf16[432,768]{1,0:T(16,128)(2,1)}', space=vmem, size = 0xa2000, scoped, tag = 'scratch operand']
  %s0 = inlined_call_operand.vmem [shape: bf16[2,8,16,896], index: 0, kind: input, shape index: {}]
  %s1 = inlined_call_operand.vmem [shape: bf16[8,432], index: 1, kind: input, shape index: {}]
  %s2 = inlined_call_operand.vmem [shape: f32[1,768], index: 2, kind: input, shape index: {}]
  %s3 = inlined_call_operand.vmem [shape: f32[2,8,768], index: 3, kind: output, shape index: {}]
  %s4 = sld [smem:[#allocation0]]
  $region45: #{downsample_forward.1} parent=0
    _
  %s6 = ssub.s32 1, %s4
  %s7 = scalar_select 0, %s6, %s4
  loop: start=0, step=1, limit=4
  $region2: #{downsample_forward.1} parent=0 // loop_pre_header
    _
  $region3: #{downsample_forward.1} parent=0 // loop_header
    %s9 = sphi 0, %s13
    %p10 = scmp.ge.s32.totalorder %s9, 4
    %s19 = sphi 0, %s21
    %s22 = sphi 0, %s19
    %s23 = sphi 0, %s22
    %s39 = sphi 0, %s23
    %s43 = sphi 0, %s43
    %s45 = sphi 0, %s43
    %s46 = sphi 0, %s45
    %s60 = sphi 0, %s46
    %s64 = sphi 0, %s64
    %s66 = sphi 0, %s64
    %s67 = sphi 0, %s66
    %s81 = sphi 0, %s67
    %s87 = sphi 0, %s89
    %s90 = sphi 0, %s87
    %s91 = sphi 0, %s90
    %s107 = sphi 0, %s91
  $region4: #{downsample_forward.1} parent=0 // loop_header_branch
    %12 = sbr.rel (%p10) target = $region8
  $region5: #{downsample_forward.1} parent=0 // loop_body
    %s14 = ssub.s32 %s9, 1
    %s15 = ssub.s32 %s9, 2
    %s16 = sadd.s32 %s9, 1
    %s17 = ssub.s32 %s9, %s16
    %p18 = scmp.eq.s32.totalorder %s17, 0
    %s20 = sadd.s32 %s19, 1
    %s21 = scalar_select %p18, %s19, %s20
    %p24 = pneg %p18
    %p25 = scmp.eq.s32.totalorder %s9, 1
    %p26 = por %p24, %p25
    %p27 = scmp.ne.s32.totalorder %s19, %s22
    %p28 = scmp.eq.s32.totalorder %s9, 0
    %p29 = por %p27, %p28
    %p30 = scmp.ne.s32.totalorder %s19, %s22
    %p31 = scmp.eq.s32.totalorder %s14, 1
    %p32 = por %p30, %p31
    %p33 = scmp.ne.s32.totalorder %s22, %s23
    %p34 = scmp.eq.s32.totalorder %s14, 0
    %p35 = por %p33, %p34
    %p36 = scmp.ne.s32.totalorder %s22, %s23
    %p37 = scmp.eq.s32.totalorder %s15, 1
    %p38 = por %p36, %p37
    %p40 = scmp.ne.s32.totalorder %s23, %s39
    %p41 = scmp.eq.s32.totalorder %s15, 0
    %p42 = por %p40, %p41
    %s44 = sadd.s32 %s43, 1
    %p47 = scmp.eq.s32.totalorder %s9, 1
    %p48 = scmp.ne.s32.totalorder %s43, %s45
    %p49 = scmp.eq.s32.totalorder %s9, 0
    %p50 = por %p48, %p49
    %p51 = scmp.ne.s32.totalorder %s43, %s45
    %p52 = scmp.eq.s32.totalorder %s14, 1
    %p53 = por %p51, %p52
    %p54 = scmp.ne.s32.totalorder %s45, %s46
    %p55 = scmp.eq.s32.totalorder %s14, 0
    %p56 = por %p54, %p55
    %p57 = scmp.ne.s32.totalorder %s45, %s46
    %p58 = scmp.eq.s32.totalorder %s15, 1
    %p59 = por %p57, %p58
    %p61 = scmp.ne.s32.totalorder %s46, %s60
    %p62 = scmp.eq.s32.totalorder %s15, 0
    %p63 = por %p61, %p62
    %s65 = sadd.s32 %s64, 1
    %p68 = scmp.eq.s32.totalorder %s9, 1
    %p69 = scmp.ne.s32.totalorder %s64, %s66
    %p70 = scmp.eq.s32.totalorder %s9, 0
    %p71 = por %p69, %p70
    %p72 = scmp.ne.s32.totalorder %s64, %s66
    %p73 = scmp.eq.s32.totalorder %s14, 1
    %p74 = por %p72, %p73
    %p75 = scmp.ne.s32.totalorder %s66, %s67
    %p76 = scmp.eq.s32.totalorder %s14, 0
    %p77 = por %p75, %p76
    %p78 = scmp.ne.s32.totalorder %s66, %s67
    %p79 = scmp.eq.s32.totalorder %s15, 1
    %p80 = por %p78, %p79
    %p82 = scmp.ne.s32.totalorder %s67, %s81
    %p83 = scmp.eq.s32.totalorder %s15, 0
    %p84 = por %p82, %p83
    %s85 = ssub.s32 %s9, %s16
    %p86 = scmp.eq.s32.totalorder %s85, 0
    %s88 = sadd.s32 %s87, 1
    %s89 = scalar_select %p86, %s87, %s88
    %p92 = pneg %p86
    %p93 = scmp.eq.s32.totalorder %s9, 1
    %p94 = por %p92, %p93
    %p95 = scmp.ne.s32.totalorder %s87, %s90
    %p96 = scmp.eq.s32.totalorder %s9, 0
    %p97 = por %p95, %p96
    %p98 = scmp.ne.s32.totalorder %s87, %s90
    %p99 = scmp.eq.s32.totalorder %s14, 1
    %p100 = por %p98, %p99
    %p101 = scmp.ne.s32.totalorder %s90, %s91
    %p102 = scmp.eq.s32.totalorder %s14, 0
    %p103 = por %p101, %p102
    %p104 = scmp.ne.s32.totalorder %s90, %s91
    %p105 = scmp.eq.s32.totalorder %s15, 1
    %p106 = por %p104, %p105
    %p108 = scmp.ne.s32.totalorder %s91, %s107
    %p109 = scmp.eq.s32.totalorder %s15, 0
    %p110 = por %p108, %p109
    %p111 = scmp.le.s32.totalorder 1, %s9
    %p112 = scmp.lt.s32.totalorder %s9, 3
    %p113 = pnand %p111, %p112
    %p114 = pneg %p113
    // Predicated region
    $region9: #{downsample_forward.1} parent=5 // pred_check
      _
    $region10: #{downsample_forward.1} parent=5 // pred_check_branch
      %116 = sbr.rel (%p113) target = $region12
    $region11: #{downsample_forward.1} parent=5 // pred_region
      %s117 = ssub.s32 %s9, 1
      // Predicated region
      $region13: #{downsample_forward.1} parent=11 // pred_check
        %p118 = pneg %p56
      $region14: #{downsample_forward.1} parent=11 // pred_check_branch
        %120 = sbr.rel (%p118) target = $region16
      $region15: #{downsample_forward.1} parent=11 // pred_region
        _
      $region16: #{downsample_forward.1} parent=11 // pred_fallthru
        _
      // Predicated region
      $region17: #{downsample_forward.1} parent=11 // pred_check
        %p121 = pneg %p77
      $region18: #{downsample_forward.1} parent=11 // pred_check_branch
        %123 = sbr.rel (%p121) target = $region20
      $region19: #{downsample_forward.1} parent=11 // pred_region
        _
      $region20: #{downsample_forward.1} parent=11 // pred_fallthru
        _
    $region12: #{downsample_forward.1} parent=5 // pred_fallthru
      _
    %p124 = scmp.lt.s32.totalorder %s9, 2
    // Predicated region
    $region21: #{downsample_forward.1} parent=5 // pred_check
      %p125 = pneg %p124
    $region22: #{downsample_forward.1} parent=5 // pred_check_branch
      %127 = sbr.rel (%p125) target = $region24
    $region23: #{downsample_forward.1} parent=5 // pred_region
      // Predicated region
      $region25: #{downsample_forward.1} parent=23 // pred_check
        %p128 = pneg %p29
      $region26: #{downsample_forward.1} parent=23 // pred_check_branch
        %130 = sbr.rel (%p128) target = $region28
      $region27: #{downsample_forward.1} parent=23 // pred_region
        %p131 = scmp.lt.s32.totalorder %s9, 1
        %s132 = scalar_select %p131, %s9, 1
        %s133 = smul.addr %s132, 112
        %s134 = smul.addr %s133, 4
        %s135 = scalar_lea.vmem %s0, %s134
      $region28: #{downsample_forward.1} parent=23 // pred_fallthru
        _
    $region24: #{downsample_forward.1} parent=5 // pred_fallthru
      _
    %p136 = scmp.le.s32.totalorder 1, %s9
    %p137 = scmp.lt.s32.totalorder %s9, 3
    %p138 = pnand %p136, %p137
    %p139 = pneg %p138
    // Predicated region
    $region29: #{downsample_forward.1} parent=5 // pred_check
      _
    $region30: #{downsample_forward.1} parent=5 // pred_check_branch
      %141 = sbr.rel (%p138) target = $region32
    $region31: #{downsample_forward.1} parent=5 // pred_region
      %s142 = ssub.s32 %s9, 1
      %p143 = scmp.lt.s32.totalorder %s14, 1
      %s144 = scalar_select %p143, %s14, 1
      %s145 = smul.addr %s144, 112
      %s146 = smul.addr %s145, 4
      %s147 = scalar_lea.vmem %s0, %s146
      %p148 = pneg %p35
      %p149 = pneg %p32
      %p150 = pneg %p56
      %p151 = pneg %p53
      %p152 = pneg %p77
      %p153 = pneg %p74
      %p154 = pneg %p103
      %p155 = pneg %p100
      %p156 = scmp.lt.s32.totalorder %s14, 1
      %s157 = scalar_select %p156, %s14, 1
      %s158 = smul.addr %s157, 6
      %s159 = smul.addr %s158, 8
      %s160 = scalar_lea.vmem %s3, %s159
      %p161 = scmp.lt.s32.totalorder %s14, 1
      %s162 = scalar_select %p161, %s14, 1
      %s163 = smul.addr %s162, 112
      %s164 = smul.addr %s163, 4
      %s165 = scalar_lea.vmem %s0, %s164
      %p166 = scmp.lt.s32.totalorder %s14, 1
      %s167 = scalar_select %p166, %s14, 1
      %s168 = smul.addr %s167, 6
      %s169 = smul.addr %s168, 8
      %s170 = scalar_lea.vmem %s3, %s169
      %v172 = vld [vmem:[%s165] sm:$0xff]
      %v173 = vld [vmem:[%s165 + $0x8] sm:$0xff]
      %v174 = vld [vmem:[%s165 + $0x10] sm:$0xff]
      %v175 = vld [vmem:[%s165 + $0x1c] sm:$0xff]
      %v176 = vld [vmem:[%s165 + $0x24] sm:$0xff]
      %v177 = vld [vmem:[%s165 + $0x2c] sm:$0xff]
      %v184 = vunpack.c.l.b16 %v172
      %v185 = vunpack.c.h.b16 %v172
      %v186 = vunpack.c.l.b16 %v173
      %v187 = vunpack.c.h.b16 %v173
      %v188 = vunpack.c.l.b16 %v174
      %v189 = vunpack.c.h.b16 %v174
      %v190 = vunpack.c.l.b16 %v175
      %v191 = vunpack.c.h.b16 %v175
      %v192 = vunpack.c.l.b16 %v176
      %v193 = vunpack.c.h.b16 %v176
      %v194 = vunpack.c.l.b16 %v177
      %v195 = vunpack.c.h.b16 %v177
      %v196 = vpack.c.b16 %v190, %v184
      %v197 = vpack.c.b16 %v191, %v185
      %v198 = vpack.c.b16 %v192, %v186
      %v199 = vpack.c.b16 %v193, %v187
      %v200 = vpack.c.b16 %v194, %v188
      %v201 = vpack.c.b16 %v195, %v189
      %208 = vst [vmem:[#allocation2] sm:$0xff] %v196
      %209 = vst [vmem:[#allocation2 + $0x8] sm:$0xff] %v197
      %210 = vst [vmem:[#allocation2 + $0x10] sm:$0xff] %v198
      %211 = vst [vmem:[#allocation2 + $0x18] sm:$0xff] %v199
      %212 = vst [vmem:[#allocation2 + $0x20] sm:$0xff] %v200
      %213 = vst [vmem:[#allocation2 + $0x28] sm:$0xff] %v201
      %s214 = scalar_lea.vmem %s165, 56
      %v215 = vld [vmem:[%s214] sm:$0xff]
      %v216 = vld [vmem:[%s214 + $0x8] sm:$0xff]
      %v217 = vld [vmem:[%s214 + $0x10] sm:$0xff]
      %v218 = vld [vmem:[%s214 + $0x1c] sm:$0xff]
      %v219 = vld [vmem:[%s214 + $0x24] sm:$0xff]
      %v220 = vld [vmem:[%s214 + $0x2c] sm:$0xff]
      %v227 = vunpack.c.l.b16 %v215
      %v228 = vunpack.c.h.b16 %v215
      %v229 = vunpack.c.l.b16 %v216
      %v230 = vunpack.c.h.b16 %v216
      %v231 = vunpack.c.l.b16 %v217
      %v232 = vunpack.c.h.b16 %v217
      %v233 = vunpack.c.l.b16 %v218
      %v234 = vunpack.c.h.b16 %v218
      %v235 = vunpack.c.l.b16 %v219
      %v236 = vunpack.c.h.b16 %v219
      %v237 = vunpack.c.l.b16 %v220
      %v238 = vunpack.c.h.b16 %v220
      %v239 = vpack.c.b16 %v233, %v227
      %v240 = vpack.c.b16 %v234, %v228
      %v241 = vpack.c.b16 %v235, %v229
      %v242 = vpack.c.b16 %v236, %v230
      %v243 = vpack.c.b16 %v237, %v231
      %v244 = vpack.c.b16 %v238, %v232
      %251 = vst [vmem:[#allocation2 + $0x30] sm:$0xff] %v239
      %252 = vst [vmem:[#allocation2 + $0x38] sm:$0xff] %v240
      %253 = vst [vmem:[#allocation2 + $0x40] sm:$0xff] %v241
      %254 = vst [vmem:[#allocation2 + $0x48] sm:$0xff] %v242
      %255 = vst [vmem:[#allocation2 + $0x50] sm:$0xff] %v243
      %256 = vst [vmem:[#allocation2 + $0x58] sm:$0xff] %v244
      %v257 = vld [vmem:[%s165] sm:$0xff]
      %v258 = vld [vmem:[%s165 + $0x8] sm:$0xff]
      %v259 = vld [vmem:[%s165 + $0x10] sm:$0xff]
      %v260 = vld [vmem:[%s165 + $0x18] sm:$0xf]
      %v261 = vld [vmem:[%s165 + $0x1c] sm:$0xff]
      %v262 = vld [vmem:[%s165 + $0x24] sm:$0xff]
      %v263 = vld [vmem:[%s165 + $0x2c] sm:$0xff]
      %v264 = vld [vmem:[%s165 + $0x34] sm:$0xf]
      %v273 = vunpack.c.l.b16 %v257
      %v274 = vunpack.c.h.b16 %v257
      %v275 = vunpack.c.l.b16 %v258
      %v276 = vunpack.c.h.b16 %v258
      %v277 = vunpack.c.l.b16 %v259
      %v278 = vunpack.c.h.b16 %v259
      %v279 = vunpack.c.l.b16 %v260
      %v280 = vunpack.c.l.b16 %v261
      %v281 = vunpack.c.h.b16 %v261
      %v282 = vunpack.c.l.b16 %v262
      %v283 = vunpack.c.h.b16 %v262
      %v284 = vunpack.c.l.b16 %v263
      %v285 = vunpack.c.h.b16 %v263
      %v286 = vunpack.c.l.b16 %v264
      %v287 = vpack.c.b16 %v280, %v273
      %v288 = vpack.c.b16 %v281, %v274
      %v289 = vpack.c.b16 %v282, %v275
      %v290 = vpack.c.b16 %v283, %v276
      %v291 = vpack.c.b16 %v284, %v277
      %v292 = vpack.c.b16 %v285, %v278
      %v293 = vpack.c.b16 %v286, %v279
      %294 = vrot.lane.b32.xlu0 %v287, 127
      %v295 = vpop.permute.xlu0 %294
      %296 = vrot.lane.b32.xlu0 %v288, 127
      %v297 = vpop.permute.xlu0 %296
      %298 = vrot.lane.b32.xlu0 %v289, 127
      %v299 = vpop.permute.xlu0 %298
      %300 = vrot.lane.b32.xlu0 %v290, 127
      %v301 = vpop.permute.xlu0 %300
      %302 = vrot.lane.b32.xlu0 %v291, 127
      %v303 = vpop.permute.xlu0 %302
      %304 = vrot.lane.b32.xlu0 %v292, 127
      %v305 = vpop.permute.xlu0 %304
      %306 = vrot.lane.b32.xlu0 %v293, 127
      %v307 = vpop.permute.xlu0 %306
      %vm308 = vcmask 1039360
      %v309 = vsel %vm308, %v295, %v297
      %v310 = vsel %vm308, %v297, %v299
      %v311 = vsel %vm308, %v299, %v301
      %v312 = vsel %vm308, %v301, %v303
      %v313 = vsel %vm308, %v303, %v305
      %v314 = vsel %vm308, %v305, %v307
      %321 = vst [vmem:[#allocation2 + $0x60] sm:$0xff] %v309
      %322 = vst [vmem:[#allocation2 + $0x68] sm:$0xff] %v310
      %323 = vst [vmem:[#allocation2 + $0x70] sm:$0xff] %v311
      %324 = vst [vmem:[#allocation2 + $0x78] sm:$0xff] %v312
      %325 = vst [vmem:[#allocation2 + $0x80] sm:$0xff] %v313
      %326 = vst [vmem:[#allocation2 + $0x88] sm:$0xff] %v314
      %s327 = scalar_lea.vmem %s165, 112
      %v328 = vld [vmem:[%s327] sm:$0xff]
      %v329 = vld [vmem:[%s327 + $0x8] sm:$0xff]
      %v330 = vld [vmem:[%s327 + $0x10] sm:$0xff]
      %v331 = vld [vmem:[%s327 + $0x1c] sm:$0xff]
      %v332 = vld [vmem:[%s327 + $0x24] sm:$0xff]
      %v333 = vld [vmem:[%s327 + $0x2c] sm:$0xff]
      %v340 = vunpack.c.l.b16 %v328
      %v341 = vunpack.c.h.b16 %v328
      %v342 = vunpack.c.l.b16 %v329
      %v343 = vunpack.c.h.b16 %v329
      %v344 = vunpack.c.l.b16 %v330
      %v345 = vunpack.c.h.b16 %v330
      %v346 = vunpack.c.l.b16 %v331
      %v347 = vunpack.c.h.b16 %v331
      %v348 = vunpack.c.l.b16 %v332
      %v349 = vunpack.c.h.b16 %v332
      %v350 = vunpack.c.l.b16 %v333
      %v351 = vunpack.c.h.b16 %v333
      %v352 = vpack.c.b16 %v346, %v340
      %v353 = vpack.c.b16 %v347, %v341
      %v354 = vpack.c.b16 %v348, %v342
      %v355 = vpack.c.b16 %v349, %v343
      %v356 = vpack.c.b16 %v350, %v344
      %v357 = vpack.c.b16 %v351, %v345
      %364 = vst [vmem:[#allocation2 + $0x90] sm:$0xff] %v352
      %365 = vst [vmem:[#allocation2 + $0x98] sm:$0xff] %v353
      %366 = vst [vmem:[#allocation2 + $0xa0] sm:$0xff] %v354
      %367 = vst [vmem:[#allocation2 + $0xa8] sm:$0xff] %v355
      %368 = vst [vmem:[#allocation2 + $0xb0] sm:$0xff] %v356
      %369 = vst [vmem:[#allocation2 + $0xb8] sm:$0xff] %v357
      %s370 = scalar_lea.vmem %s165, 168
      %v371 = vld [vmem:[%s370] sm:$0xff]
      %v372 = vld [vmem:[%s370 + $0x8] sm:$0xff]
      %v373 = vld [vmem:[%s370 + $0x10] sm:$0xff]
      %v374 = vld [vmem:[%s370 + $0x1c] sm:$0xff]
      %v375 = vld [vmem:[%s370 + $0x24] sm:$0xff]
      %v376 = vld [vmem:[%s370 + $0x2c] sm:$0xff]
      %v383 = vunpack.c.l.b16 %v371
      %v384 = vunpack.c.h.b16 %v371
      %v385 = vunpack.c.l.b16 %v372
      %v386 = vunpack.c.h.b16 %v372
      %v387 = vunpack.c.l.b16 %v373
      %v388 = vunpack.c.h.b16 %v373
      %v389 = vunpack.c.l.b16 %v374
      %v390 = vunpack.c.h.b16 %v374
      %v391 = vunpack.c.l.b16 %v375
      %v392 = vunpack.c.h.b16 %v375
      %v393 = vunpack.c.l.b16 %v376
      %v394 = vunpack.c.h.b16 %v376
      %v395 = vpack.c.b16 %v389, %v383
      %v396 = vpack.c.b16 %v390, %v384
      %v397 = vpack.c.b16 %v391, %v385
      %v398 = vpack.c.b16 %v392, %v386
      %v399 = vpack.c.b16 %v393, %v387
      %v400 = vpack.c.b16 %v394, %v388
      %407 = vst [vmem:[#allocation2 + $0xc0] sm:$0xff] %v395
      %408 = vst [vmem:[#allocation2 + $0xc8] sm:$0xff] %v396
      %409 = vst [vmem:[#allocation2 + $0xd0] sm:$0xff] %v397
      %410 = vst [vmem:[#allocation2 + $0xd8] sm:$0xff] %v398
      %411 = vst [vmem:[#allocation2 + $0xe0] sm:$0xff] %v399
      %412 = vst [vmem:[#allocation2 + $0xe8] sm:$0xff] %v400
      %v413 = vld [vmem:[%s327] sm:$0xff]
      %v414 = vld [vmem:[%s327 + $0x8] sm:$0xff]
      %v415 = vld [vmem:[%s327 + $0x10] sm:$0xff]
      %v416 = vld [vmem:[%s327 + $0x18] sm:$0xf]
      %v417 = vld [vmem:[%s327 + $0x1c] sm:$0xff]
      %v418 = vld [vmem:[%s327 + $0x24] sm:$0xff]
      %v419 = vld [vmem:[%s327 + $0x2c] sm:$0xff]
      %v420 = vld [vmem:[%s327 + $0x34] sm:$0xf]
      %v429 = vunpack.c.l.b16 %v413
      %v430 = vunpack.c.h.b16 %v413
      %v431 = vunpack.c.l.b16 %v414
      %v432 = vunpack.c.h.b16 %v414
      %v433 = vunpack.c.l.b16 %v415
      %v434 = vunpack.c.h.b16 %v415
      %v435 = vunpack.c.l.b16 %v416
      %v436 = vunpack.c.l.b16 %v417
      %v437 = vunpack.c.h.b16 %v417
      %v438 = vunpack.c.l.b16 %v418
      %v439 = vunpack.c.h.b16 %v418
      %v440 = vunpack.c.l.b16 %v419
      %v441 = vunpack.c.h.b16 %v419
      %v442 = vunpack.c.l.b16 %v420
      %v443 = vpack.c.b16 %v436, %v429
      %v444 = vpack.c.b16 %v437, %v430
      %v445 = vpack.c.b16 %v438, %v431
      %v446 = vpack.c.b16 %v439, %v432
      %v447 = vpack.c.b16 %v440, %v433
      %v448 = vpack.c.b16 %v441, %v434
      %v449 = vpack.c.b16 %v442, %v435
      %450 = vrot.lane.b32.xlu0 %v443, 127
      %v451 = vpop.permute.xlu0 %450
      %452 = vrot.lane.b32.xlu0 %v444, 127
      %v453 = vpop.permute.xlu0 %452
      %454 = vrot.lane.b32.xlu0 %v445, 127
      %v455 = vpop.permute.xlu0 %454
      %456 = vrot.lane.b32.xlu0 %v446, 127
      %v457 = vpop.permute.xlu0 %456
      %458 = vrot.lane.b32.xlu0 %v447, 127
      %v459 = vpop.permute.xlu0 %458
      %460 = vrot.lane.b32.xlu0 %v448, 127
      %v461 = vpop.permute.xlu0 %460
      %462 = vrot.lane.b32.xlu0 %v449, 127
      %v463 = vpop.permute.xlu0 %462
      %v464 = vsel %vm308, %v451, %v453
      %v465 = vsel %vm308, %v453, %v455
      %v466 = vsel %vm308, %v455, %v457
      %v467 = vsel %vm308, %v457, %v459
      %v468 = vsel %vm308, %v459, %v461
      %v469 = vsel %vm308, %v461, %v463
      %476 = vst [vmem:[#allocation2 + $0xf0] sm:$0xff] %v464
      %477 = vst [vmem:[#allocation2 + $0xf8] sm:$0xff] %v465
      %478 = vst [vmem:[#allocation2 + $0x100] sm:$0xff] %v466
      %479 = vst [vmem:[#allocation2 + $0x108] sm:$0xff] %v467
      %480 = vst [vmem:[#allocation2 + $0x110] sm:$0xff] %v468
      %481 = vst [vmem:[#allocation2 + $0x118] sm:$0xff] %v469
      %v482 = vld [vmem:[%s165] sm:$0xff]
      %v483 = vld [vmem:[%s165 + $0x8] sm:$0xff]
      %v484 = vld [vmem:[%s165 + $0x10] sm:$0xff]
      %v485 = vld [vmem:[%s165 + $0x18] sm:$0xf]
      %v486 = vld [vmem:[%s165 + $0x1c] sm:$0xff]
      %v487 = vld [vmem:[%s165 + $0x24] sm:$0xff]
      %v488 = vld [vmem:[%s165 + $0x2c] sm:$0xff]
      %v489 = vld [vmem:[%s165 + $0x34] sm:$0xf]
      %v498 = vunpack.c.l.b16 %v482
      %v499 = vunpack.c.h.b16 %v482
      %v500 = vunpack.c.l.b16 %v483
      %v501 = vunpack.c.h.b16 %v483
      %v502 = vunpack.c.l.b16 %v484
      %v503 = vunpack.c.h.b16 %v484
      %v504 = vunpack.c.l.b16 %v485
      %v505 = vunpack.c.l.b16 %v486
      %v506 = vunpack.c.h.b16 %v486
      %v507 = vunpack.c.l.b16 %v487
      %v508 = vunpack.c.h.b16 %v487
      %v509 = vunpack.c.l.b16 %v488
      %v510 = vunpack.c.h.b16 %v488
      %v511 = vunpack.c.l.b16 %v489
      %v512 = vpack.c.b16 %v505, %v498
      %v513 = vpack.c.b16 %v506, %v499
      %v514 = vpack.c.b16 %v507, %v500
      %v515 = vpack.c.b16 %v508, %v501
      %v516 = vpack.c.b16 %v509, %v502
      %v517 = vpack.c.b16 %v510, %v503
      %v518 = vpack.c.b16 %v511, %v504
      %519 = vrot.lane.b32.xlu0 %v512, 119
      %v520 = vpop.permute.xlu0 %519
      %521 = vrot.lane.b32.xlu0 %v513, 119
      %v522 = vpop.permute.xlu0 %521
      %523 = vrot.lane.b32.xlu0 %v514, 119
      %v524 = vpop.permute.xlu0 %523
      %525 = vrot.lane.b32.xlu0 %v515, 119
      %v526 = vpop.permute.xlu0 %525
      %527 = vrot.lane.b32.xlu0 %v516, 119
      %v528 = vpop.permute.xlu0 %527
      %529 = vrot.lane.b32.xlu0 %v517, 119
      %v530 = vpop.permute.xlu0 %529
      %531 = vrot.lane.b32.xlu0 %v518, 119
      %v532 = vpop.permute.xlu0 %531
      %vm533 = vcmask 973824
      %v534 = vsel %vm533, %v520, %v522
      %v535 = vsel %vm533, %v522, %v524
      %v536 = vsel %vm533, %v524, %v526
      %v537 = vsel %vm533, %v526, %v528
      %v538 = vsel %vm533, %v528, %v530
      %v539 = vsel %vm533, %v530, %v532
      %546 = vst [vmem:[#allocation2 + $0x120] sm:$0xff] %v534
      %547 = vst [vmem:[#allocation2 + $0x128] sm:$0xff] %v535
      %548 = vst [vmem:[#allocation2 + $0x130] sm:$0xff] %v536
      %549 = vst [vmem:[#allocation2 + $0x138] sm:$0xff] %v537
      %550 = vst [vmem:[#allocation2 + $0x140] sm:$0xff] %v538
      %551 = vst [vmem:[#allocation2 + $0x148] sm:$0xff] %v539
      %v552 = vld [vmem:[%s214] sm:$0xff]
      %v553 = vld [vmem:[%s214 + $0x8] sm:$0xff]
      %v554 = vld [vmem:[%s214 + $0x10] sm:$0xff]
      %v555 = vld [vmem:[%s214 + $0x18] sm:$0xf]
      %v556 = vld [vmem:[%s214 + $0x1c] sm:$0xff]
      %v557 = vld [vmem:[%s214 + $0x24] sm:$0xff]
      %v558 = vld [vmem:[%s214 + $0x2c] sm:$0xff]
      %v559 = vld [vmem:[%s214 + $0x34] sm:$0xf]
      %v568 = vunpack.c.l.b16 %v552
      %v569 = vunpack.c.h.b16 %v552
      %v570 = vunpack.c.l.b16 %v553
      %v571 = vunpack.c.h.b16 %v553
      %v572 = vunpack.c.l.b16 %v554
      %v573 = vunpack.c.h.b16 %v554
      %v574 = vunpack.c.l.b16 %v555
      %v575 = vunpack.c.l.b16 %v556
      %v576 = vunpack.c.h.b16 %v556
      %v577 = vunpack.c.l.b16 %v557
      %v578 = vunpack.c.h.b16 %v557
      %v579 = vunpack.c.l.b16 %v558
      %v580 = vunpack.c.h.b16 %v558
      %v581 = vunpack.c.l.b16 %v559
      %v582 = vpack.c.b16 %v575, %v568
      %v583 = vpack.c.b16 %v576, %v569
      %v584 = vpack.c.b16 %v577, %v570
      %v585 = vpack.c.b16 %v578, %v571
      %v586 = vpack.c.b16 %v579, %v572
      %v587 = vpack.c.b16 %v580, %v573
      %v588 = vpack.c.b16 %v581, %v574
      %589 = vrot.lane.b32.xlu0 %v582, 119
      %v590 = vpop.permute.xlu0 %589
      %591 = vrot.lane.b32.xlu0 %v583, 119
      %v592 = vpop.permute.xlu0 %591
      %593 = vrot.lane.b32.xlu0 %v584, 119
      %v594 = vpop.permute.xlu0 %593
      %595 = vrot.lane.b32.xlu0 %v585, 119
      %v596 = vpop.permute.xlu0 %595
      %597 = vrot.lane.b32.xlu0 %v586, 119
      %v598 = vpop.permute.xlu0 %597
      %599 = vrot.lane.b32.xlu0 %v587, 119
      %v600 = vpop.permute.xlu0 %599
      %601 = vrot.lane.b32.xlu0 %v588, 119
      %v602 = vpop.permute.xlu0 %601
      %v603 = vsel %vm533, %v590, %v592
      %v604 = vsel %vm533, %v592, %v594
      %v605 = vsel %vm533, %v594, %v596
      %v606 = vsel %vm533, %v596, %v598
      %v607 = vsel %vm533, %v598, %v600
      %v608 = vsel %vm533, %v600, %v602
      %615 = vst [vmem:[#allocation2 + $0x150] sm:$0xff] %v603
      %616 = vst [vmem:[#allocation2 + $0x158] sm:$0xff] %v604
      %617 = vst [vmem:[#allocation2 + $0x160] sm:$0xff] %v605
      %618 = vst [vmem:[#allocation2 + $0x168] sm:$0xff] %v606
      %619 = vst [vmem:[#allocation2 + $0x170] sm:$0xff] %v607
      %620 = vst [vmem:[#allocation2 + $0x178] sm:$0xff] %v608
      %v621 = vld [vmem:[%s165] sm:$0xff]
      %v622 = vld [vmem:[%s165 + $0x8] sm:$0xff]
      %v623 = vld [vmem:[%s165 + $0x10] sm:$0xff]
      %v624 = vld [vmem:[%s165 + $0x18] sm:$0xf]
      %v625 = vld [vmem:[%s165 + $0x1c] sm:$0xff]
      %v626 = vld [vmem:[%s165 + $0x24] sm:$0xff]
      %v627 = vld [vmem:[%s165 + $0x2c] sm:$0xff]
      %v628 = vld [vmem:[%s165 + $0x34] sm:$0xf]
      %v637 = vunpack.c.l.b16 %v621
      %v638 = vunpack.c.h.b16 %v621
      %v639 = vunpack.c.l.b16 %v622
      %v640 = vunpack.c.h.b16 %v622
      %v641 = vunpack.c.l.b16 %v623
      %v642 = vunpack.c.h.b16 %v623
      %v643 = vunpack.c.l.b16 %v624
      %v644 = vunpack.c.l.b16 %v625
      %v645 = vunpack.c.h.b16 %v625
      %v646 = vunpack.c.l.b16 %v626
      %v647 = vunpack.c.h.b16 %v626
      %v648 = vunpack.c.l.b16 %v627
      %v649 = vunpack.c.h.b16 %v627
      %v650 = vunpack.c.l.b16 %v628
      %v651 = vpack.c.b16 %v644, %v637
      %v652 = vpack.c.b16 %v645, %v638
      %v653 = vpack.c.b16 %v646, %v639
      %v654 = vpack.c.b16 %v647, %v640
      %v655 = vpack.c.b16 %v648, %v641
      %v656 = vpack.c.b16 %v649, %v642
      %v657 = vpack.c.b16 %v650, %v643
      %658 = vrot.lane.b32.xlu0 %v651, 118
      %v659 = vpop.permute.xlu0 %658
      %660 = vrot.lane.b32.xlu0 %v652, 118
      %v661 = vpop.permute.xlu0 %660
      %662 = vrot.lane.b32.xlu0 %v653, 118
      %v663 = vpop.permute.xlu0 %662
      %664 = vrot.lane.b32.xlu0 %v654, 118
      %v665 = vpop.permute.xlu0 %664
      %666 = vrot.lane.b32.xlu0 %v655, 118
      %v667 = vpop.permute.xlu0 %666
      %668 = vrot.lane.b32.xlu0 %v656, 118
      %v669 = vpop.permute.xlu0 %668
      %670 = vrot.lane.b32.xlu0 %v657, 118
      %v671 = vpop.permute.xlu0 %670
      %vm672 = vcmask 965632
      %v673 = vsel %vm672, %v659, %v661
      %v674 = vsel %vm672, %v661, %v663
      %v675 = vsel %vm672, %v663, %v665
      %v676 = vsel %vm672, %v665, %v667
      %v677 = vsel %vm672, %v667, %v669
      %v678 = vsel %vm672, %v669, %v671
      %685 = vst [vmem:[#allocation2 + $0x180] sm:$0xff] %v673
      %686 = vst [vmem:[#allocation2 + $0x188] sm:$0xff] %v674
      %687 = vst [vmem:[#allocation2 + $0x190] sm:$0xff] %v675
      %688 = vst [vmem:[#allocation2 + $0x198] sm:$0xff] %v676
      %689 = vst [vmem:[#allocation2 + $0x1a0] sm:$0xff] %v677
      %690 = vst [vmem:[#allocation2 + $0x1a8] sm:$0xff] %v678
      %s691 = scalar_lea.vmem %s165, 224
      %v692 = vld [vmem:[%s691] sm:$0xff]
      %v693 = vld [vmem:[%s691 + $0x8] sm:$0xff]
      %v694 = vld [vmem:[%s691 + $0x10] sm:$0xff]
      %v695 = vld [vmem:[%s691 + $0x1c] sm:$0xff]
      %v696 = vld [vmem:[%s691 + $0x24] sm:$0xff]
      %v697 = vld [vmem:[%s691 + $0x2c] sm:$0xff]
      %v704 = vunpack.c.l.b16 %v692
      %v705 = vunpack.c.h.b16 %v692
      %v706 = vunpack.c.l.b16 %v693
      %v707 = vunpack.c.h.b16 %v693
      %v708 = vunpack.c.l.b16 %v694
      %v709 = vunpack.c.h.b16 %v694
      %v710 = vunpack.c.l.b16 %v695
      %v711 = vunpack.c.h.b16 %v695
      %v712 = vunpack.c.l.b16 %v696
      %v713 = vunpack.c.h.b16 %v696
      %v714 = vunpack.c.l.b16 %v697
      %v715 = vunpack.c.h.b16 %v697
      %v716 = vpack.c.b16 %v710, %v704
      %v717 = vpack.c.b16 %v711, %v705
      %v718 = vpack.c.b16 %v712, %v706
      %v719 = vpack.c.b16 %v713, %v707
      %v720 = vpack.c.b16 %v714, %v708
      %v721 = vpack.c.b16 %v715, %v709
      %728 = vst [vmem:[#allocation2 + $0x1b0] sm:$0xff] %v716
      %729 = vst [vmem:[#allocation2 + $0x1b8] sm:$0xff] %v717
      %730 = vst [vmem:[#allocation2 + $0x1c0] sm:$0xff] %v718
      %731 = vst [vmem:[#allocation2 + $0x1c8] sm:$0xff] %v719
      %732 = vst [vmem:[#allocation2 + $0x1d0] sm:$0xff] %v720
      %733 = vst [vmem:[#allocation2 + $0x1d8] sm:$0xff] %v721
      %s734 = scalar_lea.vmem %s165, 280
      %v735 = vld [vmem:[%s734] sm:$0xff]
      %v736 = vld [vmem:[%s734 + $0x8] sm:$0xff]
      %v737 = vld [vmem:[%s734 + $0x10] sm:$0xff]
      %v738 = vld [vmem:[%s734 + $0x1c] sm:$0xff]
      %v739 = vld [vmem:[%s734 + $0x24] sm:$0xff]
      %v740 = vld [vmem:[%s734 + $0x2c] sm:$0xff]
      %v747 = vunpack.c.l.b16 %v735
      %v748 = vunpack.c.h.b16 %v735
      %v749 = vunpack.c.l.b16 %v736
      %v750 = vunpack.c.h.b16 %v736
      %v751 = vunpack.c.l.b16 %v737
      %v752 = vunpack.c.h.b16 %v737
      %v753 = vunpack.c.l.b16 %v738
      %v754 = vunpack.c.h.b16 %v738
      %v755 = vunpack.c.l.b16 %v739
      %v756 = vunpack.c.h.b16 %v739
      %v757 = vunpack.c.l.b16 %v740
      %v758 = vunpack.c.h.b16 %v740
      %v759 = vpack.c.b16 %v753, %v747
      %v760 = vpack.c.b16 %v754, %v748
      %v761 = vpack.c.b16 %v755, %v749
      %v762 = vpack.c.b16 %v756, %v750
      %v763 = vpack.c.b16 %v757, %v751
      %v764 = vpack.c.b16 %v758, %v752
      %771 = vst [vmem:[#allocation2 + $0x1e0] sm:$0xff] %v759
      %772 = vst [vmem:[#allocation2 + $0x1e8] sm:$0xff] %v760
      %773 = vst [vmem:[#allocation2 + $0x1f0] sm:$0xff] %v761
      %774 = vst [vmem:[#allocation2 + $0x1f8] sm:$0xff] %v762
      %775 = vst [vmem:[#allocation2 + $0x200] sm:$0xff] %v763
      %776 = vst [vmem:[#allocation2 + $0x208] sm:$0xff] %v764
      %v777 = vld [vmem:[%s691] sm:$0xff]
      %v778 = vld [vmem:[%s691 + $0x8] sm:$0xff]
      %v779 = vld [vmem:[%s691 + $0x10] sm:$0xff]
      %v780 = vld [vmem:[%s691 + $0x18] sm:$0xf]
      %v781 = vld [vmem:[%s691 + $0x1c] sm:$0xff]
      %v782 = vld [vmem:[%s691 + $0x24] sm:$0xff]
      %v783 = vld [vmem:[%s691 + $0x2c] sm:$0xff]
      %v784 = vld [vmem:[%s691 + $0x34] sm:$0xf]
      %v793 = vunpack.c.l.b16 %v777
      %v794 = vunpack.c.h.b16 %v777
      %v795 = vunpack.c.l.b16 %v778
      %v796 = vunpack.c.h.b16 %v778
      %v797 = vunpack.c.l.b16 %v779
      %v798 = vunpack.c.h.b16 %v779
      %v799 = vunpack.c.l.b16 %v780
      %v800 = vunpack.c.l.b16 %v781
      %v801 = vunpack.c.h.b16 %v781
      %v802 = vunpack.c.l.b16 %v782
      %v803 = vunpack.c.h.b16 %v782
      %v804 = vunpack.c.l.b16 %v783
      %v805 = vunpack.c.h.b16 %v783
      %v806 = vunpack.c.l.b16 %v784
      %v807 = vpack.c.b16 %v800, %v793
      %v808 = vpack.c.b16 %v801, %v794
      %v809 = vpack.c.b16 %v802, %v795
      %v810 = vpack.c.b16 %v803, %v796
      %v811 = vpack.c.b16 %v804, %v797
      %v812 = vpack.c.b16 %v805, %v798
      %v813 = vpack.c.b16 %v806, %v799
      %814 = vrot.lane.b32.xlu0 %v807, 127
      %v815 = vpop.permute.xlu0 %814
      %816 = vrot.lane.b32.xlu0 %v808, 127
      %v817 = vpop.permute.xlu0 %816
      %818 = vrot.lane.b32.xlu0 %v809, 127
      %v819 = vpop.permute.xlu0 %818
      %820 = vrot.lane.b32.xlu0 %v810, 127
      %v821 = vpop.permute.xlu0 %820
      %822 = vrot.lane.b32.xlu0 %v811, 127
      %v823 = vpop.permute.xlu0 %822
      %824 = vrot.lane.b32.xlu0 %v812, 127
      %v825 = vpop.permute.xlu0 %824
      %826 = vrot.lane.b32.xlu0 %v813, 127
      %v827 = vpop.permute.xlu0 %826
      %v828 = vsel %vm308, %v815, %v817
      %v829 = vsel %vm308, %v817, %v819
      %v830 = vsel %vm308, %v819, %v821
      %v831 = vsel %vm308, %v821, %v823
      %v832 = vsel %vm308, %v823, %v825
      %v833 = vsel %vm308, %v825, %v827
      %840 = vst [vmem:[#allocation2 + $0x210] sm:$0xff] %v828
      %841 = vst [vmem:[#allocation2 + $0x218] sm:$0xff] %v829
      %842 = vst [vmem:[#allocation2 + $0x220] sm:$0xff] %v830
      %843 = vst [vmem:[#allocation2 + $0x228] sm:$0xff] %v831
      %844 = vst [vmem:[#allocation2 + $0x230] sm:$0xff] %v832
      %845 = vst [vmem:[#allocation2 + $0x238] sm:$0xff] %v833
      %s846 = scalar_lea.vmem %s165, 336
      %v847 = vld [vmem:[%s846] sm:$0xff]
      %v848 = vld [vmem:[%s846 + $0x8] sm:$0xff]
      %v849 = vld [vmem:[%s846 + $0x10] sm:$0xff]
      %v850 = vld [vmem:[%s846 + $0x1c] sm:$0xff]
      %v851 = vld [vmem:[%s846 + $0x24] sm:$0xff]
      %v852 = vld [vmem:[%s846 + $0x2c] sm:$0xff]
      %v859 = vunpack.c.l.b16 %v847
      %v860 = vunpack.c.h.b16 %v847
      %v861 = vunpack.c.l.b16 %v848
      %v862 = vunpack.c.h.b16 %v848
      %v863 = vunpack.c.l.b16 %v849
      %v864 = vunpack.c.h.b16 %v849
      %v865 = vunpack.c.l.b16 %v850
      %v866 = vunpack.c.h.b16 %v850
      %v867 = vunpack.c.l.b16 %v851
      %v868 = vunpack.c.h.b16 %v851
      %v869 = vunpack.c.l.b16 %v852
      %v870 = vunpack.c.h.b16 %v852
      %v871 = vpack.c.b16 %v865, %v859
      %v872 = vpack.c.b16 %v866, %v860
      %v873 = vpack.c.b16 %v867, %v861
      %v874 = vpack.c.b16 %v868, %v862
      %v875 = vpack.c.b16 %v869, %v863
      %v876 = vpack.c.b16 %v870, %v864
      %883 = vst [vmem:[#allocation2 + $0x240] sm:$0xff] %v871
      %884 = vst [vmem:[#allocation2 + $0x248] sm:$0xff] %v872
      %885 = vst [vmem:[#allocation2 + $0x250] sm:$0xff] %v873
      %886 = vst [vmem:[#allocation2 + $0x258] sm:$0xff] %v874
      %887 = vst [vmem:[#allocation2 + $0x260] sm:$0xff] %v875
      %888 = vst [vmem:[#allocation2 + $0x268] sm:$0xff] %v876
      %s889 = scalar_lea.vmem %s165, 392
      %v890 = vld [vmem:[%s889] sm:$0xff]
      %v891 = vld [vmem:[%s889 + $0x8] sm:$0xff]
      %v892 = vld [vmem:[%s889 + $0x10] sm:$0xff]
      %v893 = vld [vmem:[%s889 + $0x1c] sm:$0xff]
      %v894 = vld [vmem:[%s889 + $0x24] sm:$0xff]
      %v895 = vld [vmem:[%s889 + $0x2c] sm:$0xff]
      %v902 = vunpack.c.l.b16 %v890
      %v903 = vunpack.c.h.b16 %v890
      %v904 = vunpack.c.l.b16 %v891
      %v905 = vunpack.c.h.b16 %v891
      %v906 = vunpack.c.l.b16 %v892
      %v907 = vunpack.c.h.b16 %v892
      %v908 = vunpack.c.l.b16 %v893
      %v909 = vunpack.c.h.b16 %v893
      %v910 = vunpack.c.l.b16 %v894
      %v911 = vunpack.c.h.b16 %v894
      %v912 = vunpack.c.l.b16 %v895
      %v913 = vunpack.c.h.b16 %v895
      %v914 = vpack.c.b16 %v908, %v902
      %v915 = vpack.c.b16 %v909, %v903
      %v916 = vpack.c.b16 %v910, %v904
      %v917 = vpack.c.b16 %v911, %v905
      %v918 = vpack.c.b16 %v912, %v906
      %v919 = vpack.c.b16 %v913, %v907
      %926 = vst [vmem:[#allocation2 + $0x270] sm:$0xff] %v914
      %927 = vst [vmem:[#allocation2 + $0x278] sm:$0xff] %v915
      %928 = vst [vmem:[#allocation2 + $0x280] sm:$0xff] %v916
      %929 = vst [vmem:[#allocation2 + $0x288] sm:$0xff] %v917
      %930 = vst [vmem:[#allocation2 + $0x290] sm:$0xff] %v918
      %931 = vst [vmem:[#allocation2 + $0x298] sm:$0xff] %v919
      %v932 = vld [vmem:[%s846] sm:$0xff]
      %v933 = vld [vmem:[%s846 + $0x8] sm:$0xff]
      %v934 = vld [vmem:[%s846 + $0x10] sm:$0xff]
      %v935 = vld [vmem:[%s846 + $0x18] sm:$0xf]
      %v936 = vld [vmem:[%s846 + $0x1c] sm:$0xff]
      %v937 = vld [vmem:[%s846 + $0x24] sm:$0xff]
      %v938 = vld [vmem:[%s846 + $0x2c] sm:$0xff]
      %v939 = vld [vmem:[%s846 + $0x34] sm:$0xf]
      %v948 = vunpack.c.l.b16 %v932
      %v949 = vunpack.c.h.b16 %v932
      %v950 = vunpack.c.l.b16 %v933
      %v951 = vunpack.c.h.b16 %v933
      %v952 = vunpack.c.l.b16 %v934
      %v953 = vunpack.c.h.b16 %v934
      %v954 = vunpack.c.l.b16 %v935
      %v955 = vunpack.c.l.b16 %v936
      %v956 = vunpack.c.h.b16 %v936
      %v957 = vunpack.c.l.b16 %v937
      %v958 = vunpack.c.h.b16 %v937
      %v959 = vunpack.c.l.b16 %v938
      %v960 = vunpack.c.h.b16 %v938
      %v961 = vunpack.c.l.b16 %v939
      %v962 = vpack.c.b16 %v955, %v948
      %v963 = vpack.c.b16 %v956, %v949
      %v964 = vpack.c.b16 %v957, %v950
      %v965 = vpack.c.b16 %v958, %v951
      %v966 = vpack.c.b16 %v959, %v952
      %v967 = vpack.c.b16 %v960, %v953
      %v968 = vpack.c.b16 %v961, %v954
      %969 = vrot.lane.b32.xlu0 %v962, 127
      %v970 = vpop.permute.xlu0 %969
      %971 = vrot.lane.b32.xlu0 %v963, 127
      %v972 = vpop.permute.xlu0 %971
      %973 = vrot.lane.b32.xlu0 %v964, 127
      %v974 = vpop.permute.xlu0 %973
      %975 = vrot.lane.b32.xlu0 %v965, 127
      %v976 = vpop.permute.xlu0 %975
      %977 = vrot.lane.b32.xlu0 %v966, 127
      %v978 = vpop.permute.xlu0 %977
      %979 = vrot.lane.b32.xlu0 %v967, 127
      %v980 = vpop.permute.xlu0 %979
      %981 = vrot.lane.b32.xlu0 %v968, 127
      %v982 = vpop.permute.xlu0 %981
      %v983 = vsel %vm308, %v970, %v972
      %v984 = vsel %vm308, %v972, %v974
      %v985 = vsel %vm308, %v974, %v976
      %v986 = vsel %vm308, %v976, %v978
      %v987 = vsel %vm308, %v978, %v980
      %v988 = vsel %vm308, %v980, %v982
      %995 = vst [vmem:[#allocation2 + $0x2a0] sm:$0xff] %v983
      %996 = vst [vmem:[#allocation2 + $0x2a8] sm:$0xff] %v984
      %997 = vst [vmem:[#allocation2 + $0x2b0] sm:$0xff] %v985
      %998 = vst [vmem:[#allocation2 + $0x2b8] sm:$0xff] %v986
      %999 = vst [vmem:[#allocation2 + $0x2c0] sm:$0xff] %v987
      %1000 = vst [vmem:[#allocation2 + $0x2c8] sm:$0xff] %v988
      %v1001 = vld [vmem:[%s691] sm:$0xff]
      %v1002 = vld [vmem:[%s691 + $0x8] sm:$0xff]
      %v1003 = vld [vmem:[%s691 + $0x10] sm:$0xff]
      %v1004 = vld [vmem:[%s691 + $0x18] sm:$0xf]
      %v1005 = vld [vmem:[%s691 + $0x1c] sm:$0xff]
      %v1006 = vld [vmem:[%s691 + $0x24] sm:$0xff]
      %v1007 = vld [vmem:[%s691 + $0x2c] sm:$0xff]
      %v1008 = vld [vmem:[%s691 + $0x34] sm:$0xf]
      %v1017 = vunpack.c.l.b16 %v1001
      %v1018 = vunpack.c.h.b16 %v1001
      %v1019 = vunpack.c.l.b16 %v1002
      %v1020 = vunpack.c.h.b16 %v1002
      %v1021 = vunpack.c.l.b16 %v1003
      %v1022 = vunpack.c.h.b16 %v1003
      %v1023 = vunpack.c.l.b16 %v1004
      %v1024 = vunpack.c.l.b16 %v1005
      %v1025 = vunpack.c.h.b16 %v1005
      %v1026 = vunpack.c.l.b16 %v1006
      %v1027 = vunpack.c.h.b16 %v1006
      %v1028 = vunpack.c.l.b16 %v1007
      %v1029 = vunpack.c.h.b16 %v1007
      %v1030 = vunpack.c.l.b16 %v1008
      %v1031 = vpack.c.b16 %v1024, %v1017
      %v1032 = vpack.c.b16 %v1025, %v1018
      %v1033 = vpack.c.b16 %v1026, %v1019
      %v1034 = vpack.c.b16 %v1027, %v1020
      %v1035 = vpack.c.b16 %v1028, %v1021
      %v1036 = vpack.c.b16 %v1029, %v1022
      %v1037 = vpack.c.b16 %v1030, %v1023
      %1038 = vrot.lane.b32.xlu0 %v1031, 119
      %v1039 = vpop.permute.xlu0 %1038
      %1040 = vrot.lane.b32.xlu0 %v1032, 119
      %v1041 = vpop.permute.xlu0 %1040
      %1042 = vrot.lane.b32.xlu0 %v1033, 119
      %v1043 = vpop.permute.xlu0 %1042
      %1044 = vrot.lane.b32.xlu0 %v1034, 119
      %v1045 = vpop.permute.xlu0 %1044
      %1046 = vrot.lane.b32.xlu0 %v1035, 119
      %v1047 = vpop.permute.xlu0 %1046
      %1048 = vrot.lane.b32.xlu0 %v1036, 119
      %v1049 = vpop.permute.xlu0 %1048
      %1050 = vrot.lane.b32.xlu0 %v1037, 119
      %v1051 = vpop.permute.xlu0 %1050
      %v1052 = vsel %vm533, %v1039, %v1041
      %v1053 = vsel %vm533, %v1041, %v1043
      %v1054 = vsel %vm533, %v1043, %v1045
      %v1055 = vsel %vm533, %v1045, %v1047
      %v1056 = vsel %vm533, %v1047, %v1049
      %v1057 = vsel %vm533, %v1049, %v1051
      %1064 = vst [vmem:[#allocation2 + $0x2d0] sm:$0xff] %v1052
      %1065 = vst [vmem:[#allocation2 + $0x2d8] sm:$0xff] %v1053
      %1066 = vst [vmem:[#allocation2 + $0x2e0] sm:$0xff] %v1054
      %1067 = vst [vmem:[#allocation2 + $0x2e8] sm:$0xff] %v1055
      %1068 = vst [vmem:[#allocation2 + $0x2f0] sm:$0xff] %v1056
      %1069 = vst [vmem:[#allocation2 + $0x2f8] sm:$0xff] %v1057
      %v1070 = vld [vmem:[%s734] sm:$0xff]
      %v1071 = vld [vmem:[%s734 + $0x8] sm:$0xff]
      %v1072 = vld [vmem:[%s734 + $0x10] sm:$0xff]
      %v1073 = vld [vmem:[%s734 + $0x18] sm:$0xf]
      %v1074 = vld [vmem:[%s734 + $0x1c] sm:$0xff]
      %v1075 = vld [vmem:[%s734 + $0x24] sm:$0xff]
      %v1076 = vld [vmem:[%s734 + $0x2c] sm:$0xff]
      %v1077 = vld [vmem:[%s734 + $0x34] sm:$0xf]
      %v1086 = vunpack.c.l.b16 %v1070
      %v1087 = vunpack.c.h.b16 %v1070
      %v1088 = vunpack.c.l.b16 %v1071
      %v1089 = vunpack.c.h.b16 %v1071
      %v1090 = vunpack.c.l.b16 %v1072
      %v1091 = vunpack.c.h.b16 %v1072
      %v1092 = vunpack.c.l.b16 %v1073
      %v1093 = vunpack.c.l.b16 %v1074
      %v1094 = vunpack.c.h.b16 %v1074
      %v1095 = vunpack.c.l.b16 %v1075
      %v1096 = vunpack.c.h.b16 %v1075
      %v1097 = vunpack.c.l.b16 %v1076
      %v1098 = vunpack.c.h.b16 %v1076
      %v1099 = vunpack.c.l.b16 %v1077
      %v1100 = vpack.c.b16 %v1093, %v1086
      %v1101 = vpack.c.b16 %v1094, %v1087
      %v1102 = vpack.c.b16 %v1095, %v1088
      %v1103 = vpack.c.b16 %v1096, %v1089
      %v1104 = vpack.c.b16 %v1097, %v1090
      %v1105 = vpack.c.b16 %v1098, %v1091
      %v1106 = vpack.c.b16 %v1099, %v1092
      %1107 = vrot.lane.b32.xlu0 %v1100, 119
      %v1108 = vpop.permute.xlu0 %1107
      %1109 = vrot.lane.b32.xlu0 %v1101, 119
      %v1110 = vpop.permute.xlu0 %1109
      %1111 = vrot.lane.b32.xlu0 %v1102, 119
      %v1112 = vpop.permute.xlu0 %1111
      %1113 = vrot.lane.b32.xlu0 %v1103, 119
      %v1114 = vpop.permute.xlu0 %1113
      %1115 = vrot.lane.b32.xlu0 %v1104, 119
      %v1116 = vpop.permute.xlu0 %1115
      %1117 = vrot.lane.b32.xlu0 %v1105, 119
      %v1118 = vpop.permute.xlu0 %1117
      %1119 = vrot.lane.b32.xlu0 %v1106, 119
      %v1120 = vpop.permute.xlu0 %1119
      %v1121 = vsel %vm533, %v1108, %v1110
      %v1122 = vsel %vm533, %v1110, %v1112
      %v1123 = vsel %vm533, %v1112, %v1114
      %v1124 = vsel %vm533, %v1114, %v1116
      %v1125 = vsel %vm533, %v1116, %v1118
      %v1126 = vsel %vm533, %v1118, %v1120
      %1133 = vst [vmem:[#allocation2 + $0x300] sm:$0xff] %v1121
      %1134 = vst [vmem:[#allocation2 + $0x308] sm:$0xff] %v1122
      %1135 = vst [vmem:[#allocation2 + $0x310] sm:$0xff] %v1123
      %1136 = vst [vmem:[#allocation2 + $0x318] sm:$0xff] %v1124
      %1137 = vst [vmem:[#allocation2 + $0x320] sm:$0xff] %v1125
      %1138 = vst [vmem:[#allocation2 + $0x328] sm:$0xff] %v1126
      %v1139 = vld [vmem:[%s691] sm:$0xff]
      %v1140 = vld [vmem:[%s691 + $0x8] sm:$0xff]
      %v1141 = vld [vmem:[%s691 + $0x10] sm:$0xff]
      %v1142 = vld [vmem:[%s691 + $0x18] sm:$0xf]
      %v1143 = vld [vmem:[%s691 + $0x1c] sm:$0xff]
      %v1144 = vld [vmem:[%s691 + $0x24] sm:$0xff]
      %v1145 = vld [vmem:[%s691 + $0x2c] sm:$0xff]
      %v1146 = vld [vmem:[%s691 + $0x34] sm:$0xf]
      %v1155 = vunpack.c.l.b16 %v1139
      %v1156 = vunpack.c.h.b16 %v1139
      %v1157 = vunpack.c.l.b16 %v1140
      %v1158 = vunpack.c.h.b16 %v1140
      %v1159 = vunpack.c.l.b16 %v1141
      %v1160 = vunpack.c.h.b16 %v1141
      %v1161 = vunpack.c.l.b16 %v1142
      %v1162 = vunpack.c.l.b16 %v1143
      %v1163 = vunpack.c.h.b16 %v1143
      %v1164 = vunpack.c.l.b16 %v1144
      %v1165 = vunpack.c.h.b16 %v1144
      %v1166 = vunpack.c.l.b16 %v1145
      %v1167 = vunpack.c.h.b16 %v1145
      %v1168 = vunpack.c.l.b16 %v1146
      %v1169 = vpack.c.b16 %v1162, %v1155
      %v1170 = vpack.c.b16 %v1163, %v1156
      %v1171 = vpack.c.b16 %v1164, %v1157
      %v1172 = vpack.c.b16 %v1165, %v1158
      %v1173 = vpack.c.b16 %v1166, %v1159
      %v1174 = vpack.c.b16 %v1167, %v1160
      %v1175 = vpack.c.b16 %v1168, %v1161
      %1176 = vrot.lane.b32.xlu0 %v1169, 118
      %v1177 = vpop.permute.xlu0 %1176
      %1178 = vrot.lane.b32.xlu0 %v1170, 118
      %v1179 = vpop.permute.xlu0 %1178
      %1180 = vrot.lane.b32.xlu0 %v1171, 118
      %v1181 = vpop.permute.xlu0 %1180
      %1182 = vrot.lane.b32.xlu0 %v1172, 118
      %v1183 = vpop.permute.xlu0 %1182
      %1184 = vrot.lane.b32.xlu0 %v1173, 118
      %v1185 = vpop.permute.xlu0 %1184
      %1186 = vrot.lane.b32.xlu0 %v1174, 118
      %v1187 = vpop.permute.xlu0 %1186
      %1188 = vrot.lane.b32.xlu0 %v1175, 118
      %v1189 = vpop.permute.xlu0 %1188
      %v1190 = vsel %vm672, %v1177, %v1179
      %v1191 = vsel %vm672, %v1179, %v1181
      %v1192 = vsel %vm672, %v1181, %v1183
      %v1193 = vsel %vm672, %v1183, %v1185
      %v1194 = vsel %vm672, %v1185, %v1187
      %v1195 = vsel %vm672, %v1187, %v1189
      %1202 = vst [vmem:[#allocation2 + $0x330] sm:$0xff] %v1190
      %1203 = vst [vmem:[#allocation2 + $0x338] sm:$0xff] %v1191
      %1204 = vst [vmem:[#allocation2 + $0x340] sm:$0xff] %v1192
      %1205 = vst [vmem:[#allocation2 + $0x348] sm:$0xff] %v1193
      %1206 = vst [vmem:[#allocation2 + $0x350] sm:$0xff] %v1194
      %1207 = vst [vmem:[#allocation2 + $0x358] sm:$0xff] %v1195
      %v1208 = vld [vmem:[%s165] sm:$0xff]
      %v1209 = vld [vmem:[%s165 + $0x8] sm:$0xff]
      %v1210 = vld [vmem:[%s165 + $0x10] sm:$0xff]
      %v1211 = vld [vmem:[%s165 + $0x18] sm:$0xf]
      %v1212 = vld [vmem:[%s165 + $0x1c] sm:$0xff]
      %v1213 = vld [vmem:[%s165 + $0x24] sm:$0xff]
      %v1214 = vld [vmem:[%s165 + $0x2c] sm:$0xff]
      %v1215 = vld [vmem:[%s165 + $0x34] sm:$0xf]
      %v1224 = vunpack.c.l.b16 %v1208
      %v1225 = vunpack.c.h.b16 %v1208
      %v1226 = vunpack.c.l.b16 %v1209
      %v1227 = vunpack.c.h.b16 %v1209
      %v1228 = vunpack.c.l.b16 %v1210
      %v1229 = vunpack.c.h.b16 %v1210
      %v1230 = vunpack.c.l.b16 %v1211
      %v1231 = vunpack.c.l.b16 %v1212
      %v1232 = vunpack.c.h.b16 %v1212
      %v1233 = vunpack.c.l.b16 %v1213
      %v1234 = vunpack.c.h.b16 %v1213
      %v1235 = vunpack.c.l.b16 %v1214
      %v1236 = vunpack.c.h.b16 %v1214
      %v1237 = vunpack.c.l.b16 %v1215
      %v1238 = vpack.c.b16 %v1231, %v1224
      %v1239 = vpack.c.b16 %v1232, %v1225
      %v1240 = vpack.c.b16 %v1233, %v1226
      %v1241 = vpack.c.b16 %v1234, %v1227
      %v1242 = vpack.c.b16 %v1235, %v1228
      %v1243 = vpack.c.b16 %v1236, %v1229
      %v1244 = vpack.c.b16 %v1237, %v1230
      %1245 = vrot.lane.b32.xlu0 %v1238, 47
      %v1246 = vpop.permute.xlu0 %1245
      %1247 = vrot.lane.b32.xlu0 %v1239, 47
      %v1248 = vpop.permute.xlu0 %1247
      %1249 = vrot.lane.b32.xlu0 %v1240, 47
      %v1250 = vpop.permute.xlu0 %1249
      %1251 = vrot.lane.b32.xlu0 %v1241, 47
      %v1252 = vpop.permute.xlu0 %1251
      %1253 = vrot.lane.b32.xlu0 %v1242, 47
      %v1254 = vpop.permute.xlu0 %1253
      %1255 = vrot.lane.b32.xlu0 %v1243, 47
      %v1256 = vpop.permute.xlu0 %1255
      %1257 = vrot.lane.b32.xlu0 %v1244, 47
      %v1258 = vpop.permute.xlu0 %1257
      %vm1259 = vcmask 384000
      %v1260 = vsel %vm1259, %v1246, %v1248
      %v1261 = vsel %vm1259, %v1248, %v1250
      %v1262 = vsel %vm1259, %v1250, %v1252
      %v1263 = vsel %vm1259, %v1252, %v1254
      %v1264 = vsel %vm1259, %v1254, %v1256
      %v1265 = vsel %vm1259, %v1256, %v1258
      %1272 = vst [vmem:[#allocation2 + $0x360] sm:$0xff] %v1260
      %1273 = vst [vmem:[#allocation2 + $0x368] sm:$0xff] %v1261
      %1274 = vst [vmem:[#allocation2 + $0x370] sm:$0xff] %v1262
      %1275 = vst [vmem:[#allocation2 + $0x378] sm:$0xff] %v1263
      %1276 = vst [vmem:[#allocation2 + $0x380] sm:$0xff] %v1264
      %1277 = vst [vmem:[#allocation2 + $0x388] sm:$0xff] %v1265
      %v1278 = vld [vmem:[%s214] sm:$0xff]
      %v1279 = vld [vmem:[%s214 + $0x8] sm:$0xff]
      %v1280 = vld [vmem:[%s214 + $0x10] sm:$0xff]
      %v1281 = vld [vmem:[%s214 + $0x18] sm:$0xf]
      %v1282 = vld [vmem:[%s214 + $0x1c] sm:$0xff]
      %v1283 = vld [vmem:[%s214 + $0x24] sm:$0xff]
      %v1284 = vld [vmem:[%s214 + $0x2c] sm:$0xff]
      %v1285 = vld [vmem:[%s214 + $0x34] sm:$0xf]
      %v1294 = vunpack.c.l.b16 %v1278
      %v1295 = vunpack.c.h.b16 %v1278
      %v1296 = vunpack.c.l.b16 %v1279
      %v1297 = vunpack.c.h.b16 %v1279
      %v1298 = vunpack.c.l.b16 %v1280
      %v1299 = vunpack.c.h.b16 %v1280
      %v1300 = vunpack.c.l.b16 %v1281
      %v1301 = vunpack.c.l.b16 %v1282
      %v1302 = vunpack.c.h.b16 %v1282
      %v1303 = vunpack.c.l.b16 %v1283
      %v1304 = vunpack.c.h.b16 %v1283
      %v1305 = vunpack.c.l.b16 %v1284
      %v1306 = vunpack.c.h.b16 %v1284
      %v1307 = vunpack.c.l.b16 %v1285
      %v1308 = vpack.c.b16 %v1301, %v1294
      %v1309 = vpack.c.b16 %v1302, %v1295
      %v1310 = vpack.c.b16 %v1303, %v1296
      %v1311 = vpack.c.b16 %v1304, %v1297
      %v1312 = vpack.c.b16 %v1305, %v1298
      %v1313 = vpack.c.b16 %v1306, %v1299
      %v1314 = vpack.c.b16 %v1307, %v1300
      %1315 = vrot.lane.b32.xlu0 %v1308, 47
      %v1316 = vpop.permute.xlu0 %1315
      %1317 = vrot.lane.b32.xlu0 %v1309, 47
      %v1318 = vpop.permute.xlu0 %1317
      %1319 = vrot.lane.b32.xlu0 %v1310, 47
      %v1320 = vpop.permute.xlu0 %1319
      %1321 = vrot.lane.b32.xlu0 %v1311, 47
      %v1322 = vpop.permute.xlu0 %1321
      %1323 = vrot.lane.b32.xlu0 %v1312, 47
      %v1324 = vpop.permute.xlu0 %1323
      %1325 = vrot.lane.b32.xlu0 %v1313, 47
      %v1326 = vpop.permute.xlu0 %1325
      %1327 = vrot.lane.b32.xlu0 %v1314, 47
      %v1328 = vpop.permute.xlu0 %1327
      %v1329 = vsel %vm1259, %v1316, %v1318
      %v1330 = vsel %vm1259, %v1318, %v1320
      %v1331 = vsel %vm1259, %v1320, %v1322
      %v1332 = vsel %vm1259, %v1322, %v1324
      %v1333 = vsel %vm1259, %v1324, %v1326
      %v1334 = vsel %vm1259, %v1326, %v1328
      %1341 = vst [vmem:[#allocation2 + $0x390] sm:$0xff] %v1329
      %1342 = vst [vmem:[#allocation2 + $0x398] sm:$0xff] %v1330
      %1343 = vst [vmem:[#allocation2 + $0x3a0] sm:$0xff] %v1331
      %1344 = vst [vmem:[#allocation2 + $0x3a8] sm:$0xff] %v1332
      %1345 = vst [vmem:[#allocation2 + $0x3b0] sm:$0xff] %v1333
      %1346 = vst [vmem:[#allocation2 + $0x3b8] sm:$0xff] %v1334
      %v1347 = vld [vmem:[%s165] sm:$0xff]
      %v1348 = vld [vmem:[%s165 + $0x8] sm:$0xff]
      %v1349 = vld [vmem:[%s165 + $0x10] sm:$0xff]
      %v1350 = vld [vmem:[%s165 + $0x18] sm:$0xf]
      %v1351 = vld [vmem:[%s165 + $0x1c] sm:$0xff]
      %v1352 = vld [vmem:[%s165 + $0x24] sm:$0xff]
      %v1353 = vld [vmem:[%s165 + $0x2c] sm:$0xff]
      %v1354 = vld [vmem:[%s165 + $0x34] sm:$0xf]
      %v1363 = vunpack.c.l.b16 %v1347
      %v1364 = vunpack.c.h.b16 %v1347
      %v1365 = vunpack.c.l.b16 %v1348
      %v1366 = vunpack.c.h.b16 %v1348
      %v1367 = vunpack.c.l.b16 %v1349
      %v1368 = vunpack.c.h.b16 %v1349
      %v1369 = vunpack.c.l.b16 %v1350
      %v1370 = vunpack.c.l.b16 %v1351
      %v1371 = vunpack.c.h.b16 %v1351
      %v1372 = vunpack.c.l.b16 %v1352
      %v1373 = vunpack.c.h.b16 %v1352
      %v1374 = vunpack.c.l.b16 %v1353
      %v1375 = vunpack.c.h.b16 %v1353
      %v1376 = vunpack.c.l.b16 %v1354
      %v1377 = vpack.c.b16 %v1370, %v1363
      %v1378 = vpack.c.b16 %v1371, %v1364
      %v1379 = vpack.c.b16 %v1372, %v1365
      %v1380 = vpack.c.b16 %v1373, %v1366
      %v1381 = vpack.c.b16 %v1374, %v1367
      %v1382 = vpack.c.b16 %v1375, %v1368
      %v1383 = vpack.c.b16 %v1376, %v1369
      %1384 = vrot.lane.b32.xlu0 %v1377, 46
      %v1385 = vpop.permute.xlu0 %1384
      %1386 = vrot.lane.b32.xlu0 %v1378, 46
      %v1387 = vpop.permute.xlu0 %1386
      %1388 = vrot.lane.b32.xlu0 %v1379, 46
      %v1389 = vpop.permute.xlu0 %1388
      %1390 = vrot.lane.b32.xlu0 %v1380, 46
      %v1391 = vpop.permute.xlu0 %1390
      %1392 = vrot.lane.b32.xlu0 %v1381, 46
      %v1393 = vpop.permute.xlu0 %1392
      %1394 = vrot.lane.b32.xlu0 %v1382, 46
      %v1395 = vpop.permute.xlu0 %1394
      %1396 = vrot.lane.b32.xlu0 %v1383, 46
      %v1397 = vpop.permute.xlu0 %1396
      %vm1398 = vcmask 375808
      %v1399 = vsel %vm1398, %v1385, %v1387
      %v1400 = vsel %vm1398, %v1387, %v1389
      %v1401 = vsel %vm1398, %v1389, %v1391
      %v1402 = vsel %vm1398, %v1391, %v1393
      %v1403 = vsel %vm1398, %v1393, %v1395
      %v1404 = vsel %vm1398, %v1395, %v1397
      %1411 = vst [vmem:[#allocation2 + $0x3c0] sm:$0xff] %v1399
      %1412 = vst [vmem:[#allocation2 + $0x3c8] sm:$0xff] %v1400
      %1413 = vst [vmem:[#allocation2 + $0x3d0] sm:$0xff] %v1401
      %1414 = vst [vmem:[#allocation2 + $0x3d8] sm:$0xff] %v1402
      %1415 = vst [vmem:[#allocation2 + $0x3e0] sm:$0xff] %v1403
      %1416 = vst [vmem:[#allocation2 + $0x3e8] sm:$0xff] %v1404
      %v1417 = vld [vmem:[%s327] sm:$0xff]
      %v1418 = vld [vmem:[%s327 + $0x8] sm:$0xff]
      %v1419 = vld [vmem:[%s327 + $0x10] sm:$0xff]
      %v1420 = vld [vmem:[%s327 + $0x18] sm:$0xf]
      %v1421 = vld [vmem:[%s327 + $0x1c] sm:$0xff]
      %v1422 = vld [vmem:[%s327 + $0x24] sm:$0xff]
      %v1423 = vld [vmem:[%s327 + $0x2c] sm:$0xff]
      %v1424 = vld [vmem:[%s327 + $0x34] sm:$0xf]
      %v1433 = vunpack.c.l.b16 %v1417
      %v1434 = vunpack.c.h.b16 %v1417
      %v1435 = vunpack.c.l.b16 %v1418
      %v1436 = vunpack.c.h.b16 %v1418
      %v1437 = vunpack.c.l.b16 %v1419
      %v1438 = vunpack.c.h.b16 %v1419
      %v1439 = vunpack.c.l.b16 %v1420
      %v1440 = vunpack.c.l.b16 %v1421
      %v1441 = vunpack.c.h.b16 %v1421
      %v1442 = vunpack.c.l.b16 %v1422
      %v1443 = vunpack.c.h.b16 %v1422
      %v1444 = vunpack.c.l.b16 %v1423
      %v1445 = vunpack.c.h.b16 %v1423
      %v1446 = vunpack.c.l.b16 %v1424
      %v1447 = vpack.c.b16 %v1440, %v1433
      %v1448 = vpack.c.b16 %v1441, %v1434
      %v1449 = vpack.c.b16 %v1442, %v1435
      %v1450 = vpack.c.b16 %v1443, %v1436
      %v1451 = vpack.c.b16 %v1444, %v1437
      %v1452 = vpack.c.b16 %v1445, %v1438
      %v1453 = vpack.c.b16 %v1446, %v1439
      %1454 = vrot.lane.b32.xlu0 %v1447, 47
      %v1455 = vpop.permute.xlu0 %1454
      %1456 = vrot.lane.b32.xlu0 %v1448, 47
      %v1457 = vpop.permute.xlu0 %1456
      %1458 = vrot.lane.b32.xlu0 %v1449, 47
      %v1459 = vpop.permute.xlu0 %1458
      %1460 = vrot.lane.b32.xlu0 %v1450, 47
      %v1461 = vpop.permute.xlu0 %1460
      %1462 = vrot.lane.b32.xlu0 %v1451, 47
      %v1463 = vpop.permute.xlu0 %1462
      %1464 = vrot.lane.b32.xlu0 %v1452, 47
      %v1465 = vpop.permute.xlu0 %1464
      %1466 = vrot.lane.b32.xlu0 %v1453, 47
      %v1467 = vpop.permute.xlu0 %1466
      %v1468 = vsel %vm1259, %v1455, %v1457
      %v1469 = vsel %vm1259, %v1457, %v1459
      %v1470 = vsel %vm1259, %v1459, %v1461
      %v1471 = vsel %vm1259, %v1461, %v1463
      %v1472 = vsel %vm1259, %v1463, %v1465
      %v1473 = vsel %vm1259, %v1465, %v1467
      %1480 = vst [vmem:[#allocation2 + $0x3f0] sm:$0xff] %v1468
      %1481 = vst [vmem:[#allocation2 + $0x3f8] sm:$0xff] %v1469
      %1482 = vst [vmem:[#allocation2 + $0x400] sm:$0xff] %v1470
      %1483 = vst [vmem:[#allocation2 + $0x408] sm:$0xff] %v1471
      %1484 = vst [vmem:[#allocation2 + $0x410] sm:$0xff] %v1472
      %1485 = vst [vmem:[#allocation2 + $0x418] sm:$0xff] %v1473
      %v1486 = vld [vmem:[%s370] sm:$0xff]
      %v1487 = vld [vmem:[%s370 + $0x8] sm:$0xff]
      %v1488 = vld [vmem:[%s370 + $0x10] sm:$0xff]
      %v1489 = vld [vmem:[%s370 + $0x18] sm:$0xf]
      %v1490 = vld [vmem:[%s370 + $0x1c] sm:$0xff]
      %v1491 = vld [vmem:[%s370 + $0x24] sm:$0xff]
      %v1492 = vld [vmem:[%s370 + $0x2c] sm:$0xff]
      %v1493 = vld [vmem:[%s370 + $0x34] sm:$0xf]
      %v1502 = vunpack.c.l.b16 %v1486
      %v1503 = vunpack.c.h.b16 %v1486
      %v1504 = vunpack.c.l.b16 %v1487
      %v1505 = vunpack.c.h.b16 %v1487
      %v1506 = vunpack.c.l.b16 %v1488
      %v1507 = vunpack.c.h.b16 %v1488
      %v1508 = vunpack.c.l.b16 %v1489
      %v1509 = vunpack.c.l.b16 %v1490
      %v1510 = vunpack.c.h.b16 %v1490
      %v1511 = vunpack.c.l.b16 %v1491
      %v1512 = vunpack.c.h.b16 %v1491
      %v1513 = vunpack.c.l.b16 %v1492
      %v1514 = vunpack.c.h.b16 %v1492
      %v1515 = vunpack.c.l.b16 %v1493
      %v1516 = vpack.c.b16 %v1509, %v1502
      %v1517 = vpack.c.b16 %v1510, %v1503
      %v1518 = vpack.c.b16 %v1511, %v1504
      %v1519 = vpack.c.b16 %v1512, %v1505
      %v1520 = vpack.c.b16 %v1513, %v1506
      %v1521 = vpack.c.b16 %v1514, %v1507
      %v1522 = vpack.c.b16 %v1515, %v1508
      %1523 = vrot.lane.b32.xlu0 %v1516, 47
      %v1524 = vpop.permute.xlu0 %1523
      %1525 = vrot.lane.b32.xlu0 %v1517, 47
      %v1526 = vpop.permute.xlu0 %1525
      %1527 = vrot.lane.b32.xlu0 %v1518, 47
      %v1528 = vpop.permute.xlu0 %1527
      %1529 = vrot.lane.b32.xlu0 %v1519, 47
      %v1530 = vpop.permute.xlu0 %1529
      %1531 = vrot.lane.b32.xlu0 %v1520, 47
      %v1532 = vpop.permute.xlu0 %1531
      %1533 = vrot.lane.b32.xlu0 %v1521, 47
      %v1534 = vpop.permute.xlu0 %1533
      %1535 = vrot.lane.b32.xlu0 %v1522, 47
      %v1536 = vpop.permute.xlu0 %1535
      %v1537 = vsel %vm1259, %v1524, %v1526
      %v1538 = vsel %vm1259, %v1526, %v1528
      %v1539 = vsel %vm1259, %v1528, %v1530
      %v1540 = vsel %vm1259, %v1530, %v1532
      %v1541 = vsel %vm1259, %v1532, %v1534
      %v1542 = vsel %vm1259, %v1534, %v1536
      %1549 = vst [vmem:[#allocation2 + $0x420] sm:$0xff] %v1537
      %1550 = vst [vmem:[#allocation2 + $0x428] sm:$0xff] %v1538
      %1551 = vst [vmem:[#allocation2 + $0x430] sm:$0xff] %v1539
      %1552 = vst [vmem:[#allocation2 + $0x438] sm:$0xff] %v1540
      %1553 = vst [vmem:[#allocation2 + $0x440] sm:$0xff] %v1541
      %1554 = vst [vmem:[#allocation2 + $0x448] sm:$0xff] %v1542
      %v1555 = vld [vmem:[%s327] sm:$0xff]
      %v1556 = vld [vmem:[%s327 + $0x8] sm:$0xff]
      %v1557 = vld [vmem:[%s327 + $0x10] sm:$0xff]
      %v1558 = vld [vmem:[%s327 + $0x18] sm:$0xf]
      %v1559 = vld [vmem:[%s327 + $0x1c] sm:$0xff]
      %v1560 = vld [vmem:[%s327 + $0x24] sm:$0xff]
      %v1561 = vld [vmem:[%s327 + $0x2c] sm:$0xff]
      %v1562 = vld [vmem:[%s327 + $0x34] sm:$0xf]
      %v1571 = vunpack.c.l.b16 %v1555
      %v1572 = vunpack.c.h.b16 %v1555
      %v1573 = vunpack.c.l.b16 %v1556
      %v1574 = vunpack.c.h.b16 %v1556
      %v1575 = vunpack.c.l.b16 %v1557
      %v1576 = vunpack.c.h.b16 %v1557
      %v1577 = vunpack.c.l.b16 %v1558
      %v1578 = vunpack.c.l.b16 %v1559
      %v1579 = vunpack.c.h.b16 %v1559
      %v1580 = vunpack.c.l.b16 %v1560
      %v1581 = vunpack.c.h.b16 %v1560
      %v1582 = vunpack.c.l.b16 %v1561
      %v1583 = vunpack.c.h.b16 %v1561
      %v1584 = vunpack.c.l.b16 %v1562
      %v1585 = vpack.c.b16 %v1578, %v1571
      %v1586 = vpack.c.b16 %v1579, %v1572
      %v1587 = vpack.c.b16 %v1580, %v1573
      %v1588 = vpack.c.b16 %v1581, %v1574
      %v1589 = vpack.c.b16 %v1582, %v1575
      %v1590 = vpack.c.b16 %v1583, %v1576
      %v1591 = vpack.c.b16 %v1584, %v1577
      %1592 = vrot.lane.b32.xlu0 %v1585, 46
      %v1593 = vpop.permute.xlu0 %1592
      %1594 = vrot.lane.b32.xlu0 %v1586, 46
      %v1595 = vpop.permute.xlu0 %1594
      %1596 = vrot.lane.b32.xlu0 %v1587, 46
      %v1597 = vpop.permute.xlu0 %1596
      %1598 = vrot.lane.b32.xlu0 %v1588, 46
      %v1599 = vpop.permute.xlu0 %1598
      %1600 = vrot.lane.b32.xlu0 %v1589, 46
      %v1601 = vpop.permute.xlu0 %1600
      %1602 = vrot.lane.b32.xlu0 %v1590, 46
      %v1603 = vpop.permute.xlu0 %1602
      %1604 = vrot.lane.b32.xlu0 %v1591, 46
      %v1605 = vpop.permute.xlu0 %1604
      %v1606 = vsel %vm1398, %v1593, %v1595
      %v1607 = vsel %vm1398, %v1595, %v1597
      %v1608 = vsel %vm1398, %v1597, %v1599
      %v1609 = vsel %vm1398, %v1599, %v1601
      %v1610 = vsel %vm1398, %v1601, %v1603
      %v1611 = vsel %vm1398, %v1603, %v1605
      %1618 = vst [vmem:[#allocation2 + $0x450] sm:$0xff] %v1606
      %1619 = vst [vmem:[#allocation2 + $0x458] sm:$0xff] %v1607
      %1620 = vst [vmem:[#allocation2 + $0x460] sm:$0xff] %v1608
      %1621 = vst [vmem:[#allocation2 + $0x468] sm:$0xff] %v1609
      %1622 = vst [vmem:[#allocation2 + $0x470] sm:$0xff] %v1610
      %1623 = vst [vmem:[#allocation2 + $0x478] sm:$0xff] %v1611
      %v1624 = vld [vmem:[%s165] sm:$0xff]
      %v1625 = vld [vmem:[%s165 + $0x8] sm:$0xff]
      %v1626 = vld [vmem:[%s165 + $0x10] sm:$0xff]
      %v1627 = vld [vmem:[%s165 + $0x18] sm:$0xf]
      %v1628 = vld [vmem:[%s165 + $0x1c] sm:$0xff]
      %v1629 = vld [vmem:[%s165 + $0x24] sm:$0xff]
      %v1630 = vld [vmem:[%s165 + $0x2c] sm:$0xff]
      %v1631 = vld [vmem:[%s165 + $0x34] sm:$0xf]
      %v1640 = vunpack.c.l.b16 %v1624
      %v1641 = vunpack.c.h.b16 %v1624
      %v1642 = vunpack.c.l.b16 %v1625
      %v1643 = vunpack.c.h.b16 %v1625
      %v1644 = vunpack.c.l.b16 %v1626
      %v1645 = vunpack.c.h.b16 %v1626
      %v1646 = vunpack.c.l.b16 %v1627
      %v1647 = vunpack.c.l.b16 %v1628
      %v1648 = vunpack.c.h.b16 %v1628
      %v1649 = vunpack.c.l.b16 %v1629
      %v1650 = vunpack.c.h.b16 %v1629
      %v1651 = vunpack.c.l.b16 %v1630
      %v1652 = vunpack.c.h.b16 %v1630
      %v1653 = vunpack.c.l.b16 %v1631
      %v1654 = vpack.c.b16 %v1647, %v1640
      %v1655 = vpack.c.b16 %v1648, %v1641
      %v1656 = vpack.c.b16 %v1649, %v1642
      %v1657 = vpack.c.b16 %v1650, %v1643
      %v1658 = vpack.c.b16 %v1651, %v1644
      %v1659 = vpack.c.b16 %v1652, %v1645
      %v1660 = vpack.c.b16 %v1653, %v1646
      %1661 = vrot.lane.b32.xlu0 %v1654, 38
      %v1662 = vpop.permute.xlu0 %1661
      %1663 = vrot.lane.b32.xlu0 %v1655, 38
      %v1664 = vpop.permute.xlu0 %1663
      %1665 = vrot.lane.b32.xlu0 %v1656, 38
      %v1666 = vpop.permute.xlu0 %1665
      %1667 = vrot.lane.b32.xlu0 %v1657, 38
      %v1668 = vpop.permute.xlu0 %1667
      %1669 = vrot.lane.b32.xlu0 %v1658, 38
      %v1670 = vpop.permute.xlu0 %1669
      %1671 = vrot.lane.b32.xlu0 %v1659, 38
      %v1672 = vpop.permute.xlu0 %1671
      %1673 = vrot.lane.b32.xlu0 %v1660, 38
      %v1674 = vpop.permute.xlu0 %1673
      %vm1675 = vcmask 310272
      %v1676 = vsel %vm1675, %v1662, %v1664
      %v1677 = vsel %vm1675, %v1664, %v1666
      %v1678 = vsel %vm1675, %v1666, %v1668
      %v1679 = vsel %vm1675, %v1668, %v1670
      %v1680 = vsel %vm1675, %v1670, %v1672
      %v1681 = vsel %vm1675, %v1672, %v1674
      %1688 = vst [vmem:[#allocation2 + $0x480] sm:$0xff] %v1676
      %1689 = vst [vmem:[#allocation2 + $0x488] sm:$0xff] %v1677
      %1690 = vst [vmem:[#allocation2 + $0x490] sm:$0xff] %v1678
      %1691 = vst [vmem:[#allocation2 + $0x498] sm:$0xff] %v1679
      %1692 = vst [vmem:[#allocation2 + $0x4a0] sm:$0xff] %v1680
      %1693 = vst [vmem:[#allocation2 + $0x4a8] sm:$0xff] %v1681
      %v1694 = vld [vmem:[%s214] sm:$0xff]
      %v1695 = vld [vmem:[%s214 + $0x8] sm:$0xff]
      %v1696 = vld [vmem:[%s214 + $0x10] sm:$0xff]
      %v1697 = vld [vmem:[%s214 + $0x18] sm:$0xf]
      %v1698 = vld [vmem:[%s214 + $0x1c] sm:$0xff]
      %v1699 = vld [vmem:[%s214 + $0x24] sm:$0xff]
      %v1700 = vld [vmem:[%s214 + $0x2c] sm:$0xff]
      %v1701 = vld [vmem:[%s214 + $0x34] sm:$0xf]
      %v1710 = vunpack.c.l.b16 %v1694
      %v1711 = vunpack.c.h.b16 %v1694
      %v1712 = vunpack.c.l.b16 %v1695
      %v1713 = vunpack.c.h.b16 %v1695
      %v1714 = vunpack.c.l.b16 %v1696
      %v1715 = vunpack.c.h.b16 %v1696
      %v1716 = vunpack.c.l.b16 %v1697
      %v1717 = vunpack.c.l.b16 %v1698
      %v1718 = vunpack.c.h.b16 %v1698
      %v1719 = vunpack.c.l.b16 %v1699
      %v1720 = vunpack.c.h.b16 %v1699
      %v1721 = vunpack.c.l.b16 %v1700
      %v1722 = vunpack.c.h.b16 %v1700
      %v1723 = vunpack.c.l.b16 %v1701
      %v1724 = vpack.c.b16 %v1717, %v1710
      %v1725 = vpack.c.b16 %v1718, %v1711
      %v1726 = vpack.c.b16 %v1719, %v1712
      %v1727 = vpack.c.b16 %v1720, %v1713
      %v1728 = vpack.c.b16 %v1721, %v1714
      %v1729 = vpack.c.b16 %v1722, %v1715
      %v1730 = vpack.c.b16 %v1723, %v1716
      %1731 = vrot.lane.b32.xlu0 %v1724, 38
      %v1732 = vpop.permute.xlu0 %1731
      %1733 = vrot.lane.b32.xlu0 %v1725, 38
      %v1734 = vpop.permute.xlu0 %1733
      %1735 = vrot.lane.b32.xlu0 %v1726, 38
      %v1736 = vpop.permute.xlu0 %1735
      %1737 = vrot.lane.b32.xlu0 %v1727, 38
      %v1738 = vpop.permute.xlu0 %1737
      %1739 = vrot.lane.b32.xlu0 %v1728, 38
      %v1740 = vpop.permute.xlu0 %1739
      %1741 = vrot.lane.b32.xlu0 %v1729, 38
      %v1742 = vpop.permute.xlu0 %1741
      %1743 = vrot.lane.b32.xlu0 %v1730, 38
      %v1744 = vpop.permute.xlu0 %1743
      %v1745 = vsel %vm1675, %v1732, %v1734
      %v1746 = vsel %vm1675, %v1734, %v1736
      %v1747 = vsel %vm1675, %v1736, %v1738
      %v1748 = vsel %vm1675, %v1738, %v1740
      %v1749 = vsel %vm1675, %v1740, %v1742
      %v1750 = vsel %vm1675, %v1742, %v1744
      %1757 = vst [vmem:[#allocation2 + $0x4b0] sm:$0xff] %v1745
      %1758 = vst [vmem:[#allocation2 + $0x4b8] sm:$0xff] %v1746
      %1759 = vst [vmem:[#allocation2 + $0x4c0] sm:$0xff] %v1747
      %1760 = vst [vmem:[#allocation2 + $0x4c8] sm:$0xff] %v1748
      %1761 = vst [vmem:[#allocation2 + $0x4d0] sm:$0xff] %v1749
      %1762 = vst [vmem:[#allocation2 + $0x4d8] sm:$0xff] %v1750
      %v1763 = vld [vmem:[%s165] sm:$0xff]
      %v1764 = vld [vmem:[%s165 + $0x8] sm:$0xff]
      %v1765 = vld [vmem:[%s165 + $0x10] sm:$0xff]
      %v1766 = vld [vmem:[%s165 + $0x18] sm:$0xf]
      %v1767 = vld [vmem:[%s165 + $0x1c] sm:$0xff]
      %v1768 = vld [vmem:[%s165 + $0x24] sm:$0xff]
      %v1769 = vld [vmem:[%s165 + $0x2c] sm:$0xff]
      %v1770 = vld [vmem:[%s165 + $0x34] sm:$0xf]
      %v1779 = vunpack.c.l.b16 %v1763
      %v1780 = vunpack.c.h.b16 %v1763
      %v1781 = vunpack.c.l.b16 %v1764
      %v1782 = vunpack.c.h.b16 %v1764
      %v1783 = vunpack.c.l.b16 %v1765
      %v1784 = vunpack.c.h.b16 %v1765
      %v1785 = vunpack.c.l.b16 %v1766
      %v1786 = vunpack.c.l.b16 %v1767
      %v1787 = vunpack.c.h.b16 %v1767
      %v1788 = vunpack.c.l.b16 %v1768
      %v1789 = vunpack.c.h.b16 %v1768
      %v1790 = vunpack.c.l.b16 %v1769
      %v1791 = vunpack.c.h.b16 %v1769
      %v1792 = vunpack.c.l.b16 %v1770
      %v1793 = vpack.c.b16 %v1786, %v1779
      %v1794 = vpack.c.b16 %v1787, %v1780
      %v1795 = vpack.c.b16 %v1788, %v1781
      %v1796 = vpack.c.b16 %v1789, %v1782
      %v1797 = vpack.c.b16 %v1790, %v1783
      %v1798 = vpack.c.b16 %v1791, %v1784
      %v1799 = vpack.c.b16 %v1792, %v1785
      %1800 = vrot.lane.b32.xlu0 %v1793, 37
      %v1801 = vpop.permute.xlu0 %1800
      %1802 = vrot.lane.b32.xlu0 %v1794, 37
      %v1803 = vpop.permute.xlu0 %1802
      %1804 = vrot.lane.b32.xlu0 %v1795, 37
      %v1805 = vpop.permute.xlu0 %1804
      %1806 = vrot.lane.b32.xlu0 %v1796, 37
      %v1807 = vpop.permute.xlu0 %1806
      %1808 = vrot.lane.b32.xlu0 %v1797, 37
      %v1809 = vpop.permute.xlu0 %1808
      %1810 = vrot.lane.b32.xlu0 %v1798, 37
      %v1811 = vpop.permute.xlu0 %1810
      %1812 = vrot.lane.b32.xlu0 %v1799, 37
      %v1813 = vpop.permute.xlu0 %1812
      %vm1814 = vcmask 302080
      %v1815 = vsel %vm1814, %v1801, %v1803
      %v1816 = vsel %vm1814, %v1803, %v1805
      %v1817 = vsel %vm1814, %v1805, %v1807
      %v1818 = vsel %vm1814, %v1807, %v1809
      %v1819 = vsel %vm1814, %v1809, %v1811
      %v1820 = vsel %vm1814, %v1811, %v1813
      %1827 = vst [vmem:[#allocation2 + $0x4e0] sm:$0xff] %v1815
      %1828 = vst [vmem:[#allocation2 + $0x4e8] sm:$0xff] %v1816
      %1829 = vst [vmem:[#allocation2 + $0x4f0] sm:$0xff] %v1817
      %1830 = vst [vmem:[#allocation2 + $0x4f8] sm:$0xff] %v1818
      %1831 = vst [vmem:[#allocation2 + $0x500] sm:$0xff] %v1819
      %1832 = vst [vmem:[#allocation2 + $0x508] sm:$0xff] %v1820
      %v1833 = vld [vmem:[%s1] sm:$0xff]
      %v1834 = vld [vmem:[%s1 + $0x8] sm:$0xff]
      %v1835 = vld [vmem:[#allocation2] sm:$0xff]
      %v1836 = vld [vmem:[#allocation2 + $0x8] sm:$0xff]
      %v1837 = vld [vmem:[#allocation2 + $0x10] sm:$0xff]
      %v1838 = vld [vmem:[#allocation2 + $0x18] sm:$0xff]
      %v1839 = vld [vmem:[#allocation2 + $0x20] sm:$0xff]
      %v1840 = vld [vmem:[#allocation2 + $0x28] sm:$0xff]
      %v1841 = vld [vmem:[#allocation2 + $0x30] sm:$0xff]
      %v1842 = vld [vmem:[#allocation2 + $0x38] sm:$0xff]
      %v1843 = vld [vmem:[#allocation2 + $0x40] sm:$0xff]
      %v1844 = vld [vmem:[#allocation2 + $0x48] sm:$0xff]
      %v1845 = vld [vmem:[#allocation2 + $0x50] sm:$0xff]
      %v1846 = vld [vmem:[#allocation2 + $0x58] sm:$0xff]
      %v1847 = vld [vmem:[#allocation2 + $0x60] sm:$0xff]
      %v1848 = vld [vmem:[#allocation2 + $0x68] sm:$0xff]
      %v1849 = vld [vmem:[#allocation2 + $0x70] sm:$0xff]
      %v1850 = vld [vmem:[#allocation2 + $0x78] sm:$0xff]
      %v1851 = vld [vmem:[#allocation2 + $0x80] sm:$0xff]
      %v1852 = vld [vmem:[#allocation2 + $0x88] sm:$0xff]
      %v1853 = vld [vmem:[#allocation2 + $0x90] sm:$0xff]
      %v1854 = vld [vmem:[#allocation2 + $0x98] sm:$0xff]
      %v1855 = vld [vmem:[#allocation2 + $0xa0] sm:$0xff]
      %v1856 = vld [vmem:[#allocation2 + $0xa8] sm:$0xff]
      %v1857 = vld [vmem:[#allocation2 + $0xb0] sm:$0xff]
      %v1858 = vld [vmem:[#allocation2 + $0xb8] sm:$0xff]
      %v1859 = vld [vmem:[#allocation2 + $0xc0] sm:$0xff]
      %v1860 = vld [vmem:[#allocation2 + $0xc8] sm:$0xff]
      %v1861 = vld [vmem:[#allocation2 + $0xd0] sm:$0xff]
      %v1862 = vld [vmem:[#allocation2 + $0xd8] sm:$0xff]
      %v1863 = vld [vmem:[#allocation2 + $0xe0] sm:$0xff]
      %v1864 = vld [vmem:[#allocation2 + $0xe8] sm:$0xff]
      %v1865 = vld [vmem:[#allocation2 + $0xf0] sm:$0xff]
      %v1866 = vld [vmem:[#allocation2 + $0xf8] sm:$0xff]
      %v1867 = vld [vmem:[#allocation2 + $0x100] sm:$0xff]
      %v1868 = vld [vmem:[#allocation2 + $0x108] sm:$0xff]
      %v1869 = vld [vmem:[#allocation2 + $0x110] sm:$0xff]
      %v1870 = vld [vmem:[#allocation2 + $0x118] sm:$0xff]
      %v1871 = vld [vmem:[#allocation2 + $0x120] sm:$0xff]
      %v1872 = vld [vmem:[#allocation2 + $0x128] sm:$0xff]
      %v1873 = vld [vmem:[#allocation2 + $0x130] sm:$0xff]
      %v1874 = vld [vmem:[#allocation2 + $0x138] sm:$0xff]
      %v1875 = vld [vmem:[#allocation2 + $0x140] sm:$0xff]
      %v1876 = vld [vmem:[#allocation2 + $0x148] sm:$0xff]
      %v1877 = vld [vmem:[#allocation2 + $0x150] sm:$0xff]
      %v1878 = vld [vmem:[#allocation2 + $0x158] sm:$0xff]
      %v1879 = vld [vmem:[#allocation2 + $0x160] sm:$0xff]
      %v1880 = vld [vmem:[#allocation2 + $0x168] sm:$0xff]
      %v1881 = vld [vmem:[#allocation2 + $0x170] sm:$0xff]
      %v1882 = vld [vmem:[#allocation2 + $0x178] sm:$0xff]
      %v1883 = vld [vmem:[#allocation2 + $0x180] sm:$0xff]
      %v1884 = vld [vmem:[#allocation2 + $0x188] sm:$0xff]
      %v1885 = vld [vmem:[#allocation2 + $0x190] sm:$0xff]
      %v1886 = vld [vmem:[#allocation2 + $0x198] sm:$0xff]
      %v1887 = vld [vmem:[#allocation2 + $0x1a0] sm:$0xff]
      %v1888 = vld [vmem:[#allocation2 + $0x1a8] sm:$0xff]
      %v1889 = vld [vmem:[#allocation2 + $0x1b0] sm:$0xff]
      %v1890 = vld [vmem:[#allocation2 + $0x1b8] sm:$0xff]
      %v1891 = vld [vmem:[#allocation2 + $0x1c0] sm:$0xff]
      %v1892 = vld [vmem:[#allocation2 + $0x1c8] sm:$0xff]
      %v1893 = vld [vmem:[#allocation2 + $0x1d0] sm:$0xff]
      %v1894 = vld [vmem:[#allocation2 + $0x1d8] sm:$0xff]
      %v1895 = vld [vmem:[#allocation2 + $0x1e0] sm:$0xff]
      %v1896 = vld [vmem:[#allocation2 + $0x1e8] sm:$0xff]
      %v1897 = vld [vmem:[#allocation2 + $0x1f0] sm:$0xff]
      %v1898 = vld [vmem:[#allocation2 + $0x1f8] sm:$0xff]
      %v1899 = vld [vmem:[#allocation2 + $0x200] sm:$0xff]
      %v1900 = vld [vmem:[#allocation2 + $0x208] sm:$0xff]
      %v1901 = vld [vmem:[#allocation2 + $0x210] sm:$0xff]
      %v1902 = vld [vmem:[#allocation2 + $0x218] sm:$0xff]
      %v1903 = vld [vmem:[#allocation2 + $0x220] sm:$0xff]
      %v1904 = vld [vmem:[#allocation2 + $0x228] sm:$0xff]
      %v1905 = vld [vmem:[#allocation2 + $0x230] sm:$0xff]
      %v1906 = vld [vmem:[#allocation2 + $0x238] sm:$0xff]
      %v1907 = vld [vmem:[#allocation2 + $0x240] sm:$0xff]
      %v1908 = vld [vmem:[#allocation2 + $0x248] sm:$0xff]
      %v1909 = vld [vmem:[#allocation2 + $0x250] sm:$0xff]
      %v1910 = vld [vmem:[#allocation2 + $0x258] sm:$0xff]
      %v1911 = vld [vmem:[#allocation2 + $0x260] sm:$0xff]
      %v1912 = vld [vmem:[#allocation2 + $0x268] sm:$0xff]
      %v1913 = vld [vmem:[#allocation2 + $0x270] sm:$0xff]
      %v1914 = vld [vmem:[#allocation2 + $0x278] sm:$0xff]
      %v1915 = vld [vmem:[#allocation2 + $0x280] sm:$0xff]
      %v1916 = vld [vmem:[#allocation2 + $0x288] sm:$0xff]
      %v1917 = vld [vmem:[#allocation2 + $0x290] sm:$0xff]
      %v1918 = vld [vmem:[#allocation2 + $0x298] sm:$0xff]
      %v1919 = vld [vmem:[#allocation2 + $0x2a0] sm:$0xff]
      %v1920 = vld [vmem:[#allocation2 + $0x2a8] sm:$0xff]
      %v1921 = vld [vmem:[#allocation2 + $0x2b0] sm:$0xff]
      %v1922 = vld [vmem:[#allocation2 + $0x2b8] sm:$0xff]
      %v1923 = vld [vmem:[#allocation2 + $0x2c0] sm:$0xff]
      %v1924 = vld [vmem:[#allocation2 + $0x2c8] sm:$0xff]
      %v1925 = vld [vmem:[#allocation2 + $0x2d0] sm:$0xff]
      %v1926 = vld [vmem:[#allocation2 + $0x2d8] sm:$0xff]
      %v1927 = vld [vmem:[#allocation2 + $0x2e0] sm:$0xff]
      %v1928 = vld [vmem:[#allocation2 + $0x2e8] sm:$0xff]
      %v1929 = vld [vmem:[#allocation2 + $0x2f0] sm:$0xff]
      %v1930 = vld [vmem:[#allocation2 + $0x2f8] sm:$0xff]
      %v1931 = vld [vmem:[#allocation2 + $0x300] sm:$0xff]
      %v1932 = vld [vmem:[#allocation2 + $0x308] sm:$0xff]
      %v1933 = vld [vmem:[#allocation2 + $0x310] sm:$0xff]
      %v1934 = vld [vmem:[#allocation2 + $0x318] sm:$0xff]
      %v1935 = vld [vmem:[#allocation2 + $0x320] sm:$0xff]
      %v1936 = vld [vmem:[#allocation2 + $0x328] sm:$0xff]
      %v1937 = vld [vmem:[#allocation2 + $0x330] sm:$0xff]
      %v1938 = vld [vmem:[#allocation2 + $0x338] sm:$0xff]
      %v1939 = vld [vmem:[#allocation2 + $0x340] sm:$0xff]
      %v1940 = vld [vmem:[#allocation2 + $0x348] sm:$0xff]
      %v1941 = vld [vmem:[#allocation2 + $0x350] sm:$0xff]
      %v1942 = vld [vmem:[#allocation2 + $0x358] sm:$0xff]
      %v1943 = vld [vmem:[#allocation2 + $0x360] sm:$0xff]
      %v1944 = vld [vmem:[#allocation2 + $0x368] sm:$0xff]
      %v1945 = vld [vmem:[#allocation2 + $0x370] sm:$0xff]
      %v1946 = vld [vmem:[#allocation2 + $0x378] sm:$0xff]
      %v1947 = vld [vmem:[#allocation2 + $0x380] sm:$0xff]
      %v1948 = vld [vmem:[#allocation2 + $0x388] sm:$0xff]
      %v1949 = vld [vmem:[#allocation2 + $0x390] sm:$0xff]
      %v1950 = vld [vmem:[#allocation2 + $0x398] sm:$0xff]
      %v1951 = vld [vmem:[#allocation2 + $0x3a0] sm:$0xff]
      %v1952 = vld [vmem:[#allocation2 + $0x3a8] sm:$0xff]
      %v1953 = vld [vmem:[#allocation2 + $0x3b0] sm:$0xff]
      %v1954 = vld [vmem:[#allocation2 + $0x3b8] sm:$0xff]
      %v1955 = vld [vmem:[#allocation2 + $0x3c0] sm:$0xff]
      %v1956 = vld [vmem:[#allocation2 + $0x3c8] sm:$0xff]
      %v1957 = vld [vmem:[#allocation2 + $0x3d0] sm:$0xff]
      %v1958 = vld [vmem:[#allocation2 + $0x3d8] sm:$0xff]
      %v1959 = vld [vmem:[#allocation2 + $0x3e0] sm:$0xff]
      %v1960 = vld [vmem:[#allocation2 + $0x3e8] sm:$0xff]
      %v1961 = vld [vmem:[#allocation2 + $0x3f0] sm:$0xff]
      %v1962 = vld [vmem:[#allocation2 + $0x3f8] sm:$0xff]
      %v1963 = vld [vmem:[#allocation2 + $0x400] sm:$0xff]
      %v1964 = vld [vmem:[#allocation2 + $0x408] sm:$0xff]
      %v1965 = vld [vmem:[#allocation2 + $0x410] sm:$0xff]
      %v1966 = vld [vmem:[#allocation2 + $0x418] sm:$0xff]
      %v1967 = vld [vmem:[#allocation2 + $0x420] sm:$0xff]
      %v1968 = vld [vmem:[#allocation2 + $0x428] sm:$0xff]
      %v1969 = vld [vmem:[#allocation2 + $0x430] sm:$0xff]
      %v1970 = vld [vmem:[#allocation2 + $0x438] sm:$0xff]
      %v1971 = vld [vmem:[#allocation2 + $0x440] sm:$0xff]
      %v1972 = vld [vmem:[#allocation2 + $0x448] sm:$0xff]
      %v1973 = vld [vmem:[#allocation2 + $0x450] sm:$0xff]
      %v1974 = vld [vmem:[#allocation2 + $0x458] sm:$0xff]
      %v1975 = vld [vmem:[#allocation2 + $0x460] sm:$0xff]
      %v1976 = vld [vmem:[#allocation2 + $0x468] sm:$0xff]
      %v1977 = vld [vmem:[#allocation2 + $0x470] sm:$0xff]
      %v1978 = vld [vmem:[#allocation2 + $0x478] sm:$0xff]
      %v1979 = vld [vmem:[#allocation2 + $0x480] sm:$0xff]
      %v1980 = vld [vmem:[#allocation2 + $0x488] sm:$0xff]
      %v1981 = vld [vmem:[#allocation2 + $0x490] sm:$0xff]
      %v1982 = vld [vmem:[#allocation2 + $0x498] sm:$0xff]
      %v1983 = vld [vmem:[#allocation2 + $0x4a0] sm:$0xff]
      %v1984 = vld [vmem:[#allocation2 + $0x4a8] sm:$0xff]
      %v1985 = vld [vmem:[#allocation2 + $0x4b0] sm:$0xff]
      %v1986 = vld [vmem:[#allocation2 + $0x4b8] sm:$0xff]
      %v1987 = vld [vmem:[#allocation2 + $0x4c0] sm:$0xff]
      %v1988 = vld [vmem:[#allocation2 + $0x4c8] sm:$0xff]
      %v1989 = vld [vmem:[#allocation2 + $0x4d0] sm:$0xff]
      %v1990 = vld [vmem:[#allocation2 + $0x4d8] sm:$0xff]
      %v1991 = vld [vmem:[#allocation2 + $0x4e0] sm:$0xff]
      %v1992 = vld [vmem:[#allocation2 + $0x4e8] sm:$0xff]
      %v1993 = vld [vmem:[#allocation2 + $0x4f0] sm:$0xff]
      %v1994 = vld [vmem:[#allocation2 + $0x4f8] sm:$0xff]
      %v1995 = vld [vmem:[#allocation2 + $0x500] sm:$0xff]
      %v1996 = vld [vmem:[#allocation2 + $0x508] sm:$0xff]
      %v1999 = vunpack.c.l.b16 %v1833
      %v2000 = vunpack.c.h.b16 %v1833
      %v2001 = vunpack.c.l.b16 %v1834
      %v2002 = vunpack.c.h.b16 %v1834
      %v2003 = vpack.c.b16 %v1999, %v1999
      %v2004 = vpack.c.b16 %v2000, %v2000
      %v2005 = vpack.c.b16 %v2001, %v2001
      %v2006 = vpack.c.b16 %v2002, %v2002
      %vm2010 = vcmask 392192
      %v2012 = vsel %vm2010, %v2006, 0
      %2014 = vmatprep.subr.bf16.mxu0 %v1836
      %2015 = vmatpush1.bf16.msra.mxu0 %v1835
      %2016 = vmatprep.subr.bf16.mxu0 %v1842
      %2017 = vmatpush1.bf16.msra.mxu0 %v1841
      %2018 = vmatprep.subr.bf16.mxu0 %v1848
      %2019 = vmatpush1.bf16.msra.mxu0 %v1847
      %2020 = vmatprep.subr.bf16.mxu0 %v1854
      %2021 = vmatpush1.bf16.msra.mxu0 %v1853
      %2022 = vmatprep.subr.bf16.mxu0 %v1860
      %2023 = vmatpush1.bf16.msra.mxu0 %v1859
      %2024 = vmatprep.subr.bf16.mxu0 %v1866
      %2025 = vmatpush1.bf16.msra.mxu0 %v1865
      %2026 = vmatprep.subr.bf16.mxu0 %v1872
      %2027 = vmatpush1.bf16.msra.mxu0 %v1871
      %2028 = vmatprep.subr.bf16.mxu0 %v1878
      %2029 = vmatpush1.bf16.msra.mxu0 %v1877
      %2030 = vmatprep.subr.bf16.mxu0 %v1884
      %2031 = vmatpush1.bf16.msra.mxu0 %v1883
      %2032 = vmatprep.subr.bf16.mxu0 %v1890
      %2033 = vmatpush1.bf16.msra.mxu0 %v1889
      %2034 = vmatprep.subr.bf16.mxu0 %v1896
      %2035 = vmatpush1.bf16.msra.mxu0 %v1895
      %2036 = vmatprep.subr.bf16.mxu0 %v1902
      %2037 = vmatpush1.bf16.msra.mxu0 %v1901
      %2038 = vmatprep.subr.bf16.mxu0 %v1908
      %2039 = vmatpush1.bf16.msra.mxu0 %v1907
      %2040 = vmatprep.subr.bf16.mxu0 %v1914
      %2041 = vmatpush1.bf16.msra.mxu0 %v1913
      %2042 = vmatprep.subr.bf16.mxu0 %v1920
      %2043 = vmatpush1.bf16.msra.mxu0 %v1919
      %2044 = vmatprep.subr.bf16.mxu0 %v1926
      %2045 = vmatpush1.bf16.msra.mxu0 %v1925
      %2046 = vmatprep.mubr.bf16.mxu0 %v2004
      %2047 = vmatmul.mubr.bf16.gmra.mrb[0].mxu0 %v2003
      %v2048 = vpop.f32.mrb[0].mxu0
      %v2049 = vadd.f32 0.0, %v2048
      %v2050 = vpop.f32.mrb[0].mxu0
      %v2051 = vadd.f32 0.0, %v2050
      %v2052 = vpop.f32.mrb[0].mxu0
      %v2053 = vpop.f32.mrb[0].mxu0
      %2054 = vdwg.mxu0
      %2055 = vmatprep.subr.bf16.mxu0 %v1932
      %2056 = vmatpush1.bf16.msra.mxu0 %v1931
      %2057 = vmatprep.subr.bf16.mxu0 %v1938
      %2058 = vmatpush1.bf16.msra.mxu0 %v1937
      %2059 = vmatprep.subr.bf16.mxu0 %v1944
      %2060 = vmatpush1.bf16.msra.mxu0 %v1943
      %2061 = vmatprep.subr.bf16.mxu0 %v1950
      %2062 = vmatpush1.bf16.msra.mxu0 %v1949
      %2063 = vmatprep.subr.bf16.mxu0 %v1956
      %2064 = vmatpush1.bf16.msra.mxu0 %v1955
      %2065 = vmatprep.subr.bf16.mxu0 %v1962
      %2066 = vmatpush1.bf16.msra.mxu0 %v1961
      %2067 = vmatprep.subr.bf16.mxu0 %v1968
      %2068 = vmatpush1.bf16.msra.mxu0 %v1967
      %2069 = vmatprep.subr.bf16.mxu0 %v1974
      %2070 = vmatpush1.bf16.msra.mxu0 %v1973
      %2071 = vmatprep.subr.bf16.mxu0 %v1980
      %2072 = vmatpush1.bf16.msra.mxu0 %v1979
      %2073 = vmatprep.subr.bf16.mxu0 %v1986
      %2074 = vmatpush1.bf16.msra.mxu0 %v1985
      %2075 = vmatprep.subr.bf16.mxu0 %v1992
      %2076 = vmatpush1.bf16.msra.mxu0 %v1991
      %2077 = vmatprep.subr.bf16.mxu0 0
      %2078 = vmatpush1.bf16.msra.mxu0 0
      %2079 = vmatprep.subr.bf16.mxu0 0
      %2080 = vmatpush1.bf16.msra.mxu0 0
      %2081 = vmatprep.subr.bf16.mxu0 0
      %2082 = vmatpush1.bf16.msra.mxu0 0
      %2083 = vmatprep.subr.bf16.mxu0 0
      %2084 = vmatpush1.bf16.msra.mxu0 0
      %2085 = vmatprep.subr.bf16.mxu0 0
      %2086 = vmatpush1.bf16.msra.mxu0 0
      %2087 = vmatprep.mubr.bf16.mxu0 %v2012
      %2088 = vmatmul.mubr.bf16.gmra.mrb[0].mxu0 %v2005
      %v2089 = vpop.f32.mrb[0].mxu0
      %v2090 = vadd.f32 %v2049, %v2089
      %v2091 = vpop.f32.mrb[0].mxu0
      %v2092 = vadd.f32 %v2051, %v2091
      %v2093 = vpop.f32.mrb[0].mxu0
      %v2094 = vpop.f32.mrb[0].mxu0
      %2095 = vdwg.mxu0
      %2096 = vmatprep.subr.bf16.mxu0 %v1838
      %2097 = vmatpush1.bf16.msra.mxu0 %v1837
      %2098 = vmatprep.subr.bf16.mxu0 %v1844
      %2099 = vmatpush1.bf16.msra.mxu0 %v1843
      %2100 = vmatprep.subr.bf16.mxu0 %v1850
      %2101 = vmatpush1.bf16.msra.mxu0 %v1849
      %2102 = vmatprep.subr.bf16.mxu0 %v1856
      %2103 = vmatpush1.bf16.msra.mxu0 %v1855
      %2104 = vmatprep.subr.bf16.mxu0 %v1862
      %2105 = vmatpush1.bf16.msra.mxu0 %v1861
      %2106 = vmatprep.subr.bf16.mxu0 %v1868
      %2107 = vmatpush1.bf16.msra.mxu0 %v1867
      %2108 = vmatprep.subr.bf16.mxu0 %v1874
      %2109 = vmatpush1.bf16.msra.mxu0 %v1873
      %2110 = vmatprep.subr.bf16.mxu0 %v1880
      %2111 = vmatpush1.bf16.msra.mxu0 %v1879
      %2112 = vmatprep.subr.bf16.mxu0 %v1886
      %2113 = vmatpush1.bf16.msra.mxu0 %v1885
      %2114 = vmatprep.subr.bf16.mxu0 %v1892
      %2115 = vmatpush1.bf16.msra.mxu0 %v1891
      %2116 = vmatprep.subr.bf16.mxu0 %v1898
      %2117 = vmatpush1.bf16.msra.mxu0 %v1897
      %2118 = vmatprep.subr.bf16.mxu0 %v1904
      %2119 = vmatpush1.bf16.msra.mxu0 %v1903
      %2120 = vmatprep.subr.bf16.mxu0 %v1910
      %2121 = vmatpush1.bf16.msra.mxu0 %v1909
      %2122 = vmatprep.subr.bf16.mxu0 %v1916
      %2123 = vmatpush1.bf16.msra.mxu0 %v1915
      %2124 = vmatprep.subr.bf16.mxu0 %v1922
      %2125 = vmatpush1.bf16.msra.mxu0 %v1921
      %2126 = vmatprep.subr.bf16.mxu0 %v1928
      %2127 = vmatpush1.bf16.msra.mxu0 %v1927
      %2128 = vmatprep.mubr.bf16.mxu0 %v2004
      %2129 = vmatmul.mubr.bf16.gmra.mrb[0].mxu0 %v2003
      %v2130 = vpop.f32.mrb[0].mxu0
      %v2131 = vadd.f32 0.0, %v2130
      %v2132 = vpop.f32.mrb[0].mxu0
      %v2133 = vadd.f32 0.0, %v2132
      %v2134 = vpop.f32.mrb[0].mxu0
      %v2135 = vpop.f32.mrb[0].mxu0
      %2136 = vdwg.mxu0
      %2137 = vmatprep.subr.bf16.mxu0 %v1934
      %2138 = vmatpush1.bf16.msra.mxu0 %v1933
      %2139 = vmatprep.subr.bf16.mxu0 %v1940
      %2140 = vmatpush1.bf16.msra.mxu0 %v1939
      %2141 = vmatprep.subr.bf16.mxu0 %v1946
      %2142 = vmatpush1.bf16.msra.mxu0 %v1945
      %2143 = vmatprep.subr.bf16.mxu0 %v1952
      %2144 = vmatpush1.bf16.msra.mxu0 %v1951
      %2145 = vmatprep.subr.bf16.mxu0 %v1958
      %2146 = vmatpush1.bf16.msra.mxu0 %v1957
      %2147 = vmatprep.subr.bf16.mxu0 %v1964
      %2148 = vmatpush1.bf16.msra.mxu0 %v1963
      %2149 = vmatprep.subr.bf16.mxu0 %v1970
      %2150 = vmatpush1.bf16.msra.mxu0 %v1969
      %2151 = vmatprep.subr.bf16.mxu0 %v1976
      %2152 = vmatpush1.bf16.msra.mxu0 %v1975
      %2153 = vmatprep.subr.bf16.mxu0 %v1982
      %2154 = vmatpush1.bf16.msra.mxu0 %v1981
      %2155 = vmatprep.subr.bf16.mxu0 %v1988
      %2156 = vmatpush1.bf16.msra.mxu0 %v1987
      %2157 = vmatprep.subr.bf16.mxu0 %v1994
      %2158 = vmatpush1.bf16.msra.mxu0 %v1993
      %2159 = vmatprep.subr.bf16.mxu0 0
      %2160 = vmatpush1.bf16.msra.mxu0 0
      %2161 = vmatprep.subr.bf16.mxu0 0
      %2162 = vmatpush1.bf16.msra.mxu0 0
      %2163 = vmatprep.subr.bf16.mxu0 0
      %2164 = vmatpush1.bf16.msra.mxu0 0
      %2165 = vmatprep.subr.bf16.mxu0 0
      %2166 = vmatpush1.bf16.msra.mxu0 0
      %2167 = vmatprep.subr.bf16.mxu0 0
      %2168 = vmatpush1.bf16.msra.mxu0 0
      %2169 = vmatprep.mubr.bf16.mxu0 %v2012
      %2170 = vmatmul.mubr.bf16.gmra.mrb[0].mxu0 %v2005
      %v2171 = vpop.f32.mrb[0].mxu0
      %v2172 = vadd.f32 %v2131, %v2171
      %v2173 = vpop.f32.mrb[0].mxu0
      %v2174 = vadd.f32 %v2133, %v2173
      %v2175 = vpop.f32.mrb[0].mxu0
      %v2176 = vpop.f32.mrb[0].mxu0
      %2177 = vdwg.mxu0
      %2178 = vmatprep.subr.bf16.mxu0 %v1840
      %2179 = vmatpush1.bf16.msra.mxu0 %v1839
      %2180 = vmatprep.subr.bf16.mxu0 %v1846
      %2181 = vmatpush1.bf16.msra.mxu0 %v1845
      %2182 = vmatprep.subr.bf16.mxu0 %v1852
      %2183 = vmatpush1.bf16.msra.mxu0 %v1851
      %2184 = vmatprep.subr.bf16.mxu0 %v1858
      %2185 = vmatpush1.bf16.msra.mxu0 %v1857
      %2186 = vmatprep.subr.bf16.mxu0 %v1864
      %2187 = vmatpush1.bf16.msra.mxu0 %v1863
      %2188 = vmatprep.subr.bf16.mxu0 %v1870
      %2189 = vmatpush1.bf16.msra.mxu0 %v1869
      %2190 = vmatprep.subr.bf16.mxu0 %v1876
      %2191 = vmatpush1.bf16.msra.mxu0 %v1875
      %2192 = vmatprep.subr.bf16.mxu0 %v1882
      %2193 = vmatpush1.bf16.msra.mxu0 %v1881
      %2194 = vmatprep.subr.bf16.mxu0 %v1888
      %2195 = vmatpush1.bf16.msra.mxu0 %v1887
      %2196 = vmatprep.subr.bf16.mxu0 %v1894
      %2197 = vmatpush1.bf16.msra.mxu0 %v1893
      %2198 = vmatprep.subr.bf16.mxu0 %v1900
      %2199 = vmatpush1.bf16.msra.mxu0 %v1899
      %2200 = vmatprep.subr.bf16.mxu0 %v1906
      %2201 = vmatpush1.bf16.msra.mxu0 %v1905
      %2202 = vmatprep.subr.bf16.mxu0 %v1912
      %2203 = vmatpush1.bf16.msra.mxu0 %v1911
      %2204 = vmatprep.subr.bf16.mxu0 %v1918
      %2205 = vmatpush1.bf16.msra.mxu0 %v1917
      %2206 = vmatprep.subr.bf16.mxu0 %v1924
      %2207 = vmatpush1.bf16.msra.mxu0 %v1923
      %2208 = vmatprep.subr.bf16.mxu0 %v1930
      %2209 = vmatpush1.bf16.msra.mxu0 %v1929
      %2210 = vmatprep.mubr.bf16.mxu0 %v2004
      %2211 = vmatmul.mubr.bf16.gmra.mrb[0].mxu0 %v2003
      %v2212 = vpop.f32.mrb[0].mxu0
      %v2213 = vadd.f32 0.0, %v2212
      %v2214 = vpop.f32.mrb[0].mxu0
      %v2215 = vadd.f32 0.0, %v2214
      %v2216 = vpop.f32.mrb[0].mxu0
      %v2217 = vpop.f32.mrb[0].mxu0
      %2218 = vdwg.mxu0
      %2219 = vmatprep.subr.bf16.mxu0 %v1936
      %2220 = vmatpush1.bf16.msra.mxu0 %v1935
      %2221 = vmatprep.subr.bf16.mxu0 %v1942
      %2222 = vmatpush1.bf16.msra.mxu0 %v1941
      %2223 = vmatprep.subr.bf16.mxu0 %v1948
      %2224 = vmatpush1.bf16.msra.mxu0 %v1947
      %2225 = vmatprep.subr.bf16.mxu0 %v1954
      %2226 = vmatpush1.bf16.msra.mxu0 %v1953
      %2227 = vmatprep.subr.bf16.mxu0 %v1960
      %2228 = vmatpush1.bf16.msra.mxu0 %v1959
      %2229 = vmatprep.subr.bf16.mxu0 %v1966
      %2230 = vmatpush1.bf16.msra.mxu0 %v1965
      %2231 = vmatprep.subr.bf16.mxu0 %v1972
      %2232 = vmatpush1.bf16.msra.mxu0 %v1971
      %2233 = vmatprep.subr.bf16.mxu0 %v1978
      %2234 = vmatpush1.bf16.msra.mxu0 %v1977
      %2235 = vmatprep.subr.bf16.mxu0 %v1984
      %2236 = vmatpush1.bf16.msra.mxu0 %v1983
      %2237 = vmatprep.subr.bf16.mxu0 %v1990
      %2238 = vmatpush1.bf16.msra.mxu0 %v1989
      %2239 = vmatprep.subr.bf16.mxu0 %v1996
      %2240 = vmatpush1.bf16.msra.mxu0 %v1995
      %2241 = vmatprep.subr.bf16.mxu0 0
      %2242 = vmatpush1.bf16.msra.mxu0 0
      %2243 = vmatprep.subr.bf16.mxu0 0
      %2244 = vmatpush1.bf16.msra.mxu0 0
      %2245 = vmatprep.subr.bf16.mxu0 0
      %2246 = vmatpush1.bf16.msra.mxu0 0
      %2247 = vmatprep.subr.bf16.mxu0 0
      %2248 = vmatpush1.bf16.msra.mxu0 0
      %2249 = vmatprep.subr.bf16.mxu0 0
      %2250 = vmatpush1.bf16.msra.mxu0 0
      %2251 = vmatprep.mubr.bf16.mxu0 %v2012
      %2252 = vmatmul.mubr.bf16.gmra.mrb[0].mxu0 %v2005
      %v2253 = vpop.f32.mrb[0].mxu0
      %v2254 = vadd.f32 %v2213, %v2253
      %v2255 = vpop.f32.mrb[0].mxu0
      %v2256 = vadd.f32 %v2215, %v2255
      %v2257 = vpop.f32.mrb[0].mxu0
      %v2258 = vpop.f32.mrb[0].mxu0
      %2259 = vdwg.mxu0
      %v2260 = vld [vmem:[%s2] sm:$0x3f]
      %v2262 = vlaneseq
      %v2263 = vshrl.u32 %v2262, 7
      %v2264 = vsub.s32 0, %v2263
      %v2265 = vrot.slane %v2260, %v2264
      %v2266 = vlaneseq
      %v2267 = vshrl.u32 %v2266, 7
      %v2268 = vsub.s32 1, %v2267
      %v2269 = vrot.slane %v2260, %v2268
      %v2270 = vlaneseq
      %v2271 = vshrl.u32 %v2270, 7
      %v2272 = vsub.s32 2, %v2271
      %v2273 = vrot.slane %v2260, %v2272
      %v2274 = vlaneseq
      %v2275 = vshrl.u32 %v2274, 7
      %v2276 = vsub.s32 3, %v2275
      %v2277 = vrot.slane %v2260, %v2276
      %v2278 = vlaneseq
      %v2279 = vshrl.u32 %v2278, 7
      %v2280 = vsub.s32 4, %v2279
      %v2281 = vrot.slane %v2260, %v2280
      %v2282 = vlaneseq
      %v2283 = vshrl.u32 %v2282, 7
      %v2284 = vsub.s32 5, %v2283
      %v2285 = vrot.slane %v2260, %v2284
      %v2292 = vmul.f32 %v2090, %v2265
      %v2293 = vmul.f32 %v2092, %v2269
      %v2294 = vmul.f32 %v2172, %v2273
      %v2295 = vmul.f32 %v2174, %v2277
      %v2296 = vmul.f32 %v2254, %v2281
      %v2297 = vmul.f32 %v2256, %v2285
      %v2298 = vadd.f32 %v2292, %v2293
      %v2299 = vadd.f32 %v2298, %v2294
      %v2300 = vadd.f32 %v2299, %v2295
      %v2301 = vadd.f32 %v2300, %v2296
      %v2302 = vadd.f32 %v2301, %v2297
      %2303 = vadd.xlane.f32.xlu0 %v2302
      %v2304 = vpop.xlane.xlu0 %2303
      %v2305 = vmul.f32 %v2304, 0.001953125
      %v2306 = vsub.f32 %v2090, %v2305
      %v2307 = vsub.f32 %v2092, %v2305
      %v2308 = vsub.f32 %v2172, %v2305
      %v2309 = vsub.f32 %v2174, %v2305
      %v2310 = vsub.f32 %v2254, %v2305
      %v2311 = vsub.f32 %v2256, %v2305
      %v2312 = vmul.f32 %v2306, %v2265
      %v2313 = vmul.f32 %v2307, %v2269
      %v2314 = vmul.f32 %v2308, %v2273
      %v2315 = vmul.f32 %v2309, %v2277
      %v2316 = vmul.f32 %v2310, %v2281
      %v2317 = vmul.f32 %v2311, %v2285
      %v2318 = vmul.f32 %v2312, %v2312
      %v2319 = vmul.f32 %v2313, %v2313
      %v2320 = vmul.f32 %v2314, %v2314
      %v2321 = vmul.f32 %v2315, %v2315
      %v2322 = vmul.f32 %v2316, %v2316
      %v2323 = vmul.f32 %v2317, %v2317
      %v2324 = vadd.f32 %v2318, %v2319
      %v2325 = vadd.f32 %v2324, %v2320
      %v2326 = vadd.f32 %v2325, %v2321
      %v2327 = vadd.f32 %v2326, %v2322
      %v2328 = vadd.f32 %v2327, %v2323
      %2329 = vadd.xlane.f32.xlu0 %v2328
      %v2330 = vpop.xlane.xlu0 %2329
      %v2331 = vmul.f32 %v2330, 0.001953125
      %v2332 = vadd.f32 %v2331, 1e-05
      %v2333 = vrsqrt.pop %v2332
      %v2334 = vmul.f32 %v2312, %v2333
      %v2335 = vmul.f32 %v2313, %v2333
      %v2336 = vmul.f32 %v2314, %v2333
      %v2337 = vmul.f32 %v2315, %v2333
      %v2338 = vmul.f32 %v2316, %v2333
      %v2339 = vmul.f32 %v2317, %v2333
      %vm2340 = vcmp.ge.f32.partialorder %v2334, 0.0
      %vm2341 = vcmp.ge.f32.partialorder %v2335, 0.0
      %vm2342 = vcmp.ge.f32.partialorder %v2336, 0.0
      %vm2343 = vcmp.ge.f32.partialorder %v2337, 0.0
      %vm2344 = vcmp.ge.f32.partialorder %v2338, 0.0
      %vm2345 = vcmp.ge.f32.partialorder %v2339, 0.0
      %v2346 = vmul.f32 %v2334, 0.2
      %v2347 = vmul.f32 %v2335, 0.2
      %v2348 = vmul.f32 %v2336, 0.2
      %v2349 = vmul.f32 %v2337, 0.2
      %v2350 = vmul.f32 %v2338, 0.2
      %v2351 = vmul.f32 %v2339, 0.2
      %v2352 = vsel %vm2340, %v2334, %v2346
      %v2353 = vsel %vm2341, %v2335, %v2347
      %v2354 = vsel %vm2342, %v2336, %v2348
      %v2355 = vsel %vm2343, %v2337, %v2349
      %v2356 = vsel %vm2344, %v2338, %v2350
      %v2357 = vsel %vm2345, %v2339, %v2351
      %2358 = vst [vmem:[%s170] sm:$0xff] %v2352
      %2359 = vst [vmem:[%s170 + $0x8] sm:$0xff] %v2353
      %2360 = vst [vmem:[%s170 + $0x10] sm:$0xff] %v2354
      %2361 = vst [vmem:[%s170 + $0x18] sm:$0xff] %v2355
      %2362 = vst [vmem:[%s170 + $0x20] sm:$0xff] %v2356
      %2363 = vst [vmem:[%s170 + $0x28] sm:$0xff] %v2357
      %p2364 = scmp.lt.s32.totalorder %s14, 1
      %s2365 = scalar_select %p2364, %s14, 1
      %s2366 = smul.addr %s2365, 6
      %s2367 = smul.addr %s2366, 8
      %s2368 = scalar_lea.vmem %s3, %s2367
      // Predicated region
      $region33: #{downsample_forward.1} parent=31 // pred_check
        %p2369 = pneg %p100
      $region34: #{downsample_forward.1} parent=31 // pred_check_branch
        %2371 = sbr.rel (%p2369) target = $region36
      $region35: #{downsample_forward.1} parent=31 // pred_region
        _
      $region36: #{downsample_forward.1} parent=31 // pred_fallthru
        _
    $region32: #{downsample_forward.1} parent=5 // pred_fallthru
      _
    %p2372 = scmp.le.s32.totalorder 2, %s9
    // Predicated region
    $region37: #{downsample_forward.1} parent=5 // pred_check
      %p2373 = pneg %p2372
    $region38: #{downsample_forward.1} parent=5 // pred_check_branch
      %2375 = sbr.rel (%p2373) target = $region40
    $region39: #{downsample_forward.1} parent=5 // pred_region
      %s2376 = ssub.s32 %s9, 2
      // Predicated region
      $region41: #{downsample_forward.1} parent=39 // pred_check
        %p2377 = pneg %p106
      $region42: #{downsample_forward.1} parent=39 // pred_check_branch
        %2379 = sbr.rel (%p2377) target = $region44
      $region43: #{downsample_forward.1} parent=39 // pred_region
        %p2380 = scmp.lt.s32.totalorder %s15, 1
        %s2381 = scalar_select %p2380, %s15, 1
        %s2382 = smul.addr %s2381, 6
        %s2383 = smul.addr %s2382, 8
        %s2384 = scalar_lea.vmem %s3, %s2383
      $region44: #{downsample_forward.1} parent=39 // pred_fallthru
        _
    $region40: #{downsample_forward.1} parent=5 // pred_fallthru
      _
  $region6: #{downsample_forward.1} parent=0 // loop_footer
    %s13 = sadd.s32 1, %s9
  $region7: #{downsample_forward.1} parent=0 // loop_footer_branch
    %8 = sbr.rel target = $region3
  $region8: #{downsample_forward.1} parent=0 // loop_exit
    _

</llo_original>
